<compile_context>
chip_gen: v7x
topology: tpu7x:2x2x1
jax: 0.10.0
libtpu: 0.0.40
codegen_flags: <defaults>
</compile_context>

<pallas_src>
import jax
import jax.numpy as jnp
from jax.experimental import pallas as pl
from jax.experimental.pallas import tpu as pltpu


# ------------------------- Kernel A: attention + GRU -------------------------
def attn_gru_kernel(
    emb_ref, hid_ref,                       # (1,H) f32 residents
    w_attn_ref, b_attn_ref, enc_ref,        # streamed: (2H,Lt) bf16, (1,Lt) f32, (H,Lt) bf16
    w_comb_ref, b_comb_ref,                 # (2H,H), (1,H) f32 residents
    w_ih_ref, b_ih_ref, w_hh_ref, b_hh_ref, # GRU (H,3H)/(1,3H) f32 residents (r,z,n)
    attnw_ref, hnew_ref, hbf16_ref,         # outputs: (1,L) f32, (1,H) f32, (1,H) bf16
    m_sc, s_sc, app_sc,                     # scratch: (1,1), (1,1), (1,H) f32
):
    f32, bf16 = jnp.float32, jnp.bfloat16
    j = pl.program_id(0)
    nl = pl.num_programs(0)
    H = hid_ref.shape[-1]
    l_tile = w_attn_ref.shape[-1]

    @pl.when(j == 0)
    def _init():
        m_sc[...] = jnp.full_like(m_sc, -jnp.inf)
        s_sc[...] = jnp.zeros_like(s_sc)
        app_sc[...] = jnp.zeros_like(app_sc)

    emb = emb_ref[...]                                        # (1, H)
    hid = hid_ref[...]                                        # (1, H)
    emb_hid = jnp.concatenate([emb, hid], axis=-1).astype(bf16)   # (1, 2H)

    # scores for this L tile (f32 accumulation on the MXU)
    scores = (jnp.dot(emb_hid, w_attn_ref[...], preferred_element_type=f32)
              + b_attn_ref[...])                              # (1, Lt)
    off = pl.multiple_of(j * l_tile, 128)
    attnw_ref[:, pl.ds(off, l_tile)] = scores                 # raw scores; normalized at end

    # online softmax statistics + attn_applied accumulator (flash style)
    m_prev = m_sc[...]
    m_new = jnp.maximum(m_prev, jnp.max(scores, axis=-1, keepdims=True))
    alpha = jnp.exp(m_prev - m_new)
    p = jnp.exp(scores - m_new)                               # (1, Lt)
    s_sc[...] = alpha * s_sc[...] + jnp.sum(p, axis=-1, keepdims=True)
    # enc is lane-dense (H, Lt): contract the lane (L) dim of both operands.
    app_sc[...] = alpha * app_sc[...] + jax.lax.dot_general(
        p.astype(bf16), enc_ref[...], (((1,), (1,)), ((), ())),
        preferred_element_type=f32)                           # (1, H)
    m_sc[...] = m_new

    @pl.when(j == nl - 1)
    def _finalize():
        inv = 1.0 / s_sc[...]                # exact divide; off the critical path
        attnw_ref[...] = jnp.exp(attnw_ref[...] - m_sc[...]) * inv
        applied = app_sc[...] * inv                           # (1, H)

        # output = relu(attn_combine(cat(emb, attn_applied)))
        comb_in = jnp.concatenate([emb, applied], axis=-1)    # (1, 2H)
        x = jnp.maximum(
            jnp.dot(comb_in, w_comb_ref[...], preferred_element_type=f32)
            + b_comb_ref[...], 0.0)                           # (1, H)

        # single-step GRU cell (PyTorch gate order r, z, n), fused 3H matmuls
        gi = jnp.dot(x, w_ih_ref[...], preferred_element_type=f32) + b_ih_ref[...]
        gh = jnp.dot(hid, w_hh_ref[...], preferred_element_type=f32) + b_hh_ref[...]
        r = jax.nn.sigmoid(gi[:, 0:H] + gh[:, 0:H])
        z = jax.nn.sigmoid(gi[:, H:2 * H] + gh[:, H:2 * H])
        n = jnp.tanh(gi[:, 2 * H:3 * H] + r * gh[:, 2 * H:3 * H])
        h_new = (1.0 - z) * n + z * hid                       # (1, H)

        hnew_ref[...] = h_new
        hbf16_ref[...] = h_new.astype(bf16)    # cast once; reused every vocab step


# ---------------- Kernel B: vocab projection + online log-softmax ------------
def vocab_logsoftmax_kernel(h_ref, wo_ref, bo_ref, logp_ref, m_sc, s_sc):
    f32 = jnp.float32
    j = pl.program_id(0)
    nv = pl.num_programs(0)
    v_tile = wo_ref.shape[-1]

    @pl.when(j == 0)
    def _init():
        m_sc[...] = jnp.full_like(m_sc, -jnp.inf)
        s_sc[...] = jnp.zeros_like(s_sc)

    logits = (jnp.dot(h_ref[...], wo_ref[...], preferred_element_type=f32)
              + bo_ref[...])                                  # (1, Vt)
    off = pl.multiple_of(j * v_tile, 128)
    logp_ref[:, pl.ds(off, v_tile)] = logits                  # raw logits, resident row

    # online logsumexp stats, hidden under the next weight-tile DMA
    m_prev = m_sc[...]
    m_new = jnp.maximum(m_prev, jnp.max(logits, axis=-1, keepdims=True))
    s_sc[...] = (s_sc[...] * jnp.exp(m_prev - m_new)
                 + jnp.sum(jnp.exp(logits - m_new), axis=-1, keepdims=True))
    m_sc[...] = m_new

    @pl.when(j == nv - 1)
    def _finalize():
        lse = m_sc[...] + jnp.log(s_sc[...])
        logp_ref[...] = logp_ref[...] - lse                   # cheap VPU subtract only


# ------------------------------- tile selection -------------------------------
def _pick_tile(total, requested, *, lane=128, max_bytes=None, bytes_per_col=0):
    """Largest lane-multiple tile <= requested that divides `total` and fits budget."""
    assert total % lane == 0, "lane dim must be a multiple of 128"
    t = min(requested, total)
    if max_bytes is not None and bytes_per_col > 0:
        t = min(t, max(lane, max_bytes // bytes_per_col))
    t = max(lane, (t // lane) * lane)
    while total % t != 0:
        t -= lane
    return t


# ---------------------------------- wrapper -----------------------------------
def attn_decoder_forward(token_id, hidden, encoder_outputs, params, *,
                         l_tile=2048, v_tile=2048):
    """token_id: int32 scalar; hidden: (1,1,H); encoder_outputs: (L,H) f32."""
    H = hidden.shape[-1]
    L = encoder_outputs.shape[0]
    V = params["wo"].shape[1]

    # double-buffered streamed-tile VMEM budget (comfortable on v7x's 64 MiB)
    tile_budget = 24 * 1024 * 1024
    l_tile = _pick_tile(L, l_tile, max_bytes=tile_budget,
                        bytes_per_col=2 * (2 * H * 2 + H * 2 + 4))
    v_tile = _pick_tile(V, v_tile, max_bytes=tile_budget,
                        bytes_per_col=2 * (H * 2 + 4))

    # glue: embedding row gather; dropout(eval) == identity
    embedded = params["emb_table"][token_id][None, :]          # (1, H) f32
    hid2d = hidden.reshape(1, H)                               # (1, H) f32
    # lane-dense bf16 layout: L on the lane axis (production code should emit
    # encoder outputs in this layout/dtype directly instead of converting here)
    enc_hl = encoder_outputs.T.astype(jnp.bfloat16)            # (H, L) bf16

    vmem_resident = pl.BlockSpec(memory_space=pltpu.MemorySpace.VMEM)

    # ---- kernel A: attention + GRU, streamed over L ----
    attn_w, h_new, h_bf16 = pl.pallas_call(
        attn_gru_kernel,
        out_shape=(jax.ShapeDtypeStruct((1, L), jnp.float32),
                   jax.ShapeDtypeStruct((1, H), jnp.float32),
                   jax.ShapeDtypeStruct((1, H), jnp.bfloat16)),
        grid_spec=pltpu.PrefetchScalarGridSpec(
            num_scalar_prefetch=0,
            grid=(L // l_tile,),
            in_specs=[
                vmem_resident, vmem_resident,                      # emb, hid
                pl.BlockSpec((2 * H, l_tile), lambda j: (0, j)),   # w_attn tile (bf16)
                pl.BlockSpec((1, l_tile), lambda j: (0, j)),       # b_attn tile
                pl.BlockSpec((H, l_tile), lambda j: (0, j)),       # enc tile (bf16)
                vmem_resident, vmem_resident,                      # w_comb, b_comb
                vmem_resident, vmem_resident,                      # w_ih, b_ih
                vmem_resident, vmem_resident,                      # w_hh, b_hh
            ],
            out_specs=[
                pl.BlockSpec((1, L), lambda j: (0, 0)),            # resident attn row
                pl.BlockSpec((1, H), lambda j: (0, 0)),
                pl.BlockSpec((1, H), lambda j: (0, 0)),
            ],
            scratch_shapes=[pltpu.VMEM((1, 1), jnp.float32),       # running max
                            pltpu.VMEM((1, 1), jnp.float32),       # running sum-exp
                            pltpu.VMEM((1, H), jnp.float32)]),     # applied accumulator
        compiler_params=pltpu.CompilerParams(
            dimension_semantics=("arbitrary",),
            vmem_limit_bytes=48 * 1024 * 1024),
    )(embedded, hid2d,
      params["w_attn"], params["b_attn"], enc_hl,
      params["w_comb"], params["b_comb"],
      params["w_ih"], params["b_ih"], params["w_hh"], params["b_hh"])

    # ---- kernel B: vocab projection + online log-softmax, streamed over V ----
    logp = pl.pallas_call(
        vocab_logsoftmax_kernel,
        out_shape=jax.ShapeDtypeStruct((1, V), jnp.float32),
        grid_spec=pltpu.PrefetchScalarGridSpec(
            num_scalar_prefetch=0,
            grid=(V // v_tile,),
            in_specs=[
                vmem_resident,                                     # h_new (bf16)
                pl.BlockSpec((H, v_tile), lambda j: (0, j)),       # wo tile (bf16)
                pl.BlockSpec((1, v_tile), lambda j: (0, j)),       # bo tile
            ],
            out_specs=pl.BlockSpec((1, V), lambda j: (0, 0)),      # resident logp row
            scratch_shapes=[pltpu.VMEM((1, 1), jnp.float32),
                            pltpu.VMEM((1, 1), jnp.float32)]),
        compiler_params=pltpu.CompilerParams(
            dimension_semantics=("arbitrary",),
            vmem_limit_bytes=48 * 1024 * 1024),
    )(h_bf16, params["wo"], params["bo"])

    return logp, h_new.reshape(1, 1, H), attn_w


# ---------------------------- parameter construction --------------------------
def make_params(key, hidden_size, output_size, max_length):
    H, V, L = hidden_size, output_size, max_length
    ks = jax.random.split(key, 11)

    def unif(k, shape, bound):
        return jax.random.uniform(k, shape, jnp.float32, -bound, bound)

    b2h = 1.0 / jnp.sqrt(2.0 * H)
    bh = 1.0 / jnp.sqrt(1.0 * H)

    return dict(
        emb_table=jax.random.normal(ks[0], (V, H), jnp.float32),
        # big streamed weights in bf16 (HBM-bandwidth bound at real sizes)
        w_attn=unif(ks[1], (2 * H, L), b2h).astype(jnp.bfloat16),
        b_attn=unif(ks[2], (1, L), b2h),
        w_comb=unif(ks[3], (2 * H, H), b2h),
        b_comb=unif(ks[4], (1, H), b2h),
        # GRU weights pre-transposed, gate order r, z, n (fused 3H lane axis)
        w_ih=unif(ks[5], (H, 3 * H), bh),
        b_ih=unif(ks[6], (1, 3 * H), bh),
        w_hh=unif(ks[7], (H, 3 * H), bh),
        b_hh=unif(ks[8], (1, 3 * H), bh),
        wo=unif(ks[9], (H, V), bh).astype(jnp.bfloat16),
        bo=unif(ks[10], (1, V), bh),
    )


# ----------------------------- pure-JAX reference ------------------------------
def reference_forward(token_id, hidden, encoder_outputs, params):
    H = hidden.shape[-1]
    f32, bf16 = jnp.float32, jnp.bfloat16
    emb = params["emb_table"][token_id][None, :]
    hid = hidden.reshape(1, H)
    emb_hid = jnp.concatenate([emb, hid], axis=-1).astype(bf16)
    scores = jnp.dot(emb_hid, params["w_attn"],
                     preferred_element_type=f32) + params["b_attn"]
    attn_w = jax.nn.softmax(scores, axis=-1)
    applied = jnp.dot(attn_w.astype(bf16), encoder_outputs.astype(bf16),
                      preferred_element_type=f32)              # (1, H)
    x = jax.nn.relu(jnp.concatenate([emb, applied], axis=-1) @ params["w_comb"]
                    + params["b_comb"])
    gi = x @ params["w_ih"] + params["b_ih"]
    gh = hid @ params["w_hh"] + params["b_hh"]
    r = jax.nn.sigmoid(gi[:, 0:H] + gh[:, 0:H])
    z = jax.nn.sigmoid(gi[:, H:2 * H] + gh[:, H:2 * H])
    n = jnp.tanh(gi[:, 2 * H:] + r * gh[:, 2 * H:])
    h_new = (1.0 - z) * n + z * hid
    logits = jnp.dot(h_new.astype(bf16), params["wo"],
                     preferred_element_type=f32) + params["bo"]
    logp = jax.nn.log_softmax(logits, axis=-1)
    return logp, h_new.reshape(1, 1, H), attn_w


# ------------------------------------ main -------------------------------------
if __name__ == "__main__":
    HIDDEN_SIZE = 32
    OUTPUT_SIZE = 8192   # vocab size (small stand-in for ~70000)
    MAX_LENGTH = 1024    # small stand-in for 70000
    L_TILE = 256         # -> 4 streamed attention steps (exercises online softmax)
    V_TILE = 2048        # -> 4 streamed vocab steps (exercises online log-softmax)

    key = jax.random.PRNGKey(0)
    kp, kh, ke = jax.random.split(key, 3)

    params = make_params(kp, HIDDEN_SIZE, OUTPUT_SIZE, MAX_LENGTH)

    token_id = jnp.array(3, dtype=jnp.int32)
    hidden = 0.1 * jax.random.normal(kh, (1, 1, HIDDEN_SIZE), dtype=jnp.float32)
    encoder_outputs = jax.random.normal(
        ke, (MAX_LENGTH, HIDDEN_SIZE), dtype=jnp.float32)

    logp, h_new, attn_w = attn_decoder_forward(
        token_id, hidden, encoder_outputs, params, l_tile=L_TILE, v_tile=V_TILE)
    jax.block_until_ready((logp, h_new, attn_w))

    # correctness check vs pure-JAX reference (tolerances account for the bf16
    # MXU-edge casts used identically-in-spirit on both sides)
    logp_r, h_r, w_r = reference_forward(token_id, hidden, encoder_outputs, params)
    assert jnp.allclose(attn_w, w_r, atol=1e-4, rtol=1e-3), "attn_weights mismatch"
    assert jnp.allclose(h_new, h_r, atol=5e-3, rtol=5e-3), "hidden mismatch"
    assert jnp.allclose(logp, logp_r, atol=2e-2, rtol=1e-2), "log_probs mismatch"

    # sanity: distributions normalize
    assert jnp.allclose(jnp.sum(attn_w), 1.0, atol=1e-3)
    assert jnp.allclose(jnp.sum(jnp.exp(logp)), 1.0, atol=1e-3)

    assert logp.shape == (1, OUTPUT_SIZE)
    assert h_new.shape == (1, 1, HIDDEN_SIZE)
    assert attn_w.shape == (1, MAX_LENGTH)

    print("KERNEL_OK")
</pallas_src>

<mosaic_0001>
module attributes {stable_mosaic.version = 11 : i64} {
  func.func @attn_gru_kernel(%arg0: i32, %arg1: memref<1x32xf32, #tpu.memory_space<vmem>>, %arg2: memref<1x32xf32, #tpu.memory_space<vmem>>, %arg3: memref<64x256xbf16, #tpu.memory_space<vmem>>, %arg4: memref<1x256xf32, #tpu.memory_space<vmem>>, %arg5: memref<32x256xbf16, #tpu.memory_space<vmem>>, %arg6: memref<64x32xf32, #tpu.memory_space<vmem>>, %arg7: memref<1x32xf32, #tpu.memory_space<vmem>>, %arg8: memref<32x96xf32, #tpu.memory_space<vmem>>, %arg9: memref<1x96xf32, #tpu.memory_space<vmem>>, %arg10: memref<32x96xf32, #tpu.memory_space<vmem>>, %arg11: memref<1x96xf32, #tpu.memory_space<vmem>>, %arg12: memref<1x1024xf32, #tpu.memory_space<vmem>>, %arg13: memref<1x32xf32, #tpu.memory_space<vmem>>, %arg14: memref<1x32xbf16, #tpu.memory_space<vmem>>, %arg15: memref<1x1xf32, #tpu.memory_space<vmem>>, %arg16: memref<1x1xf32, #tpu.memory_space<vmem>>, %arg17: memref<1x32xf32, #tpu.memory_space<vmem>>) attributes {dimension_semantics = [#tpu.dimension_semantics<arbitrary>], iteration_bounds = array<i64: 4>, scalar_prefetch = 0 : i64, scratch_operands = 3 : i64, tpu.core_type = #tpu.core_type<tc>, window_params = [{pipeline_mode = #tpu.pipeline_mode<synchronous>, transform_indices = @transform_0, window_bounds = array<i64: 1, 32>}, {pipeline_mode = #tpu.pipeline_mode<synchronous>, transform_indices = @transform_1, window_bounds = array<i64: 1, 32>}, {transform_indices = @transform_2, window_bounds = array<i64: 64, 256>}, {transform_indices = @transform_3, window_bounds = array<i64: 1, 256>}, {transform_indices = @transform_4, window_bounds = array<i64: 32, 256>}, {pipeline_mode = #tpu.pipeline_mode<synchronous>, transform_indices = @transform_5, window_bounds = array<i64: 64, 32>}, {pipeline_mode = #tpu.pipeline_mode<synchronous>, transform_indices = @transform_6, window_bounds = array<i64: 1, 32>}, {pipeline_mode = #tpu.pipeline_mode<synchronous>, transform_indices = @transform_7, window_bounds = array<i64: 32, 96>}, {pipeline_mode = #tpu.pipeline_mode<synchronous>, transform_indices = @transform_8, window_bounds = array<i64: 1, 96>}, {pipeline_mode = #tpu.pipeline_mode<synchronous>, transform_indices = @transform_9, window_bounds = array<i64: 32, 96>}, {pipeline_mode = #tpu.pipeline_mode<synchronous>, transform_indices = @transform_10, window_bounds = array<i64: 1, 96>}, {pipeline_mode = #tpu.pipeline_mode<synchronous>, transform_indices = @transform_11, window_bounds = array<i64: 1, 1024>}, {pipeline_mode = #tpu.pipeline_mode<synchronous>, transform_indices = @transform_12, window_bounds = array<i64: 1, 32>}, {pipeline_mode = #tpu.pipeline_mode<synchronous>, transform_indices = @transform_13, window_bounds = array<i64: 1, 32>}]} {
    %c0_i32 = arith.constant 0 : i32
    %0 = arith.cmpi eq, %arg0, %c0_i32 : i32
    %1 = arith.extui %0 : i1 to i32
    %c0_i32_0 = arith.constant 0 : i32
    %2 = arith.cmpi ne, %1, %c0_i32_0 : i32
    scf.if %2 {
      %cst_27 = arith.constant 0xFF800000 : f32
      %42 = vector.broadcast %cst_27 : f32 to vector<1x1xf32>
      %c0_28 = arith.constant 0 : index
      %c0_29 = arith.constant 0 : index
      %43 = vector.load %arg15[%c0_28, %c0_29] : memref<1x1xf32, #tpu.memory_space<vmem>>, vector<1x1xf32>
      tpu.vector_store %arg15[%c0_28, %c0_29], %42 {strides = array<i32>} : memref<1x1xf32, #tpu.memory_space<vmem>>, vector<1x1xf32>,
      %cst_30 = arith.constant 0.000000e+00 : f32
      %44 = vector.broadcast %cst_30 : f32 to vector<1x1xf32>
      %c0_31 = arith.constant 0 : index
      %c0_32 = arith.constant 0 : index
      %45 = vector.load %arg16[%c0_31, %c0_32] : memref<1x1xf32, #tpu.memory_space<vmem>>, vector<1x1xf32>
      tpu.vector_store %arg16[%c0_31, %c0_32], %44 {strides = array<i32>} : memref<1x1xf32, #tpu.memory_space<vmem>>, vector<1x1xf32>,
      %cst_33 = arith.constant 0.000000e+00 : f32
      %46 = vector.broadcast %cst_33 : f32 to vector<1x32xf32>
      %c0_34 = arith.constant 0 : index
      %c0_35 = arith.constant 0 : index
      %47 = vector.load %arg17[%c0_34, %c0_35] : memref<1x32xf32, #tpu.memory_space<vmem>>, vector<1x32xf32>
      tpu.vector_store %arg17[%c0_34, %c0_35], %46 {strides = array<i32>} : memref<1x32xf32, #tpu.memory_space<vmem>>, vector<1x32xf32>,
    } else {
    }
    %c0 = arith.constant 0 : index
    %c0_1 = arith.constant 0 : index
    %3 = vector.load %arg1[%c0, %c0_1] : memref<1x32xf32, #tpu.memory_space<vmem>>, vector<1x32xf32>
    %c0_2 = arith.constant 0 : index
    %c0_3 = arith.constant 0 : index
    %4 = vector.load %arg2[%c0_2, %c0_3] : memref<1x32xf32, #tpu.memory_space<vmem>>, vector<1x32xf32>
    %5 = tpu.concatenate %3, %4 in 1 : vector<1x32xf32>, vector<1x32xf32> -> vector<1x64xf32>
    %6 = arith.truncf %5 : vector<1x64xf32> to vector<1x64xbf16>
    %c0_4 = arith.constant 0 : index
    %c0_5 = arith.constant 0 : index
    %7 = vector.load %arg3[%c0_4, %c0_5] : memref<64x256xbf16, #tpu.memory_space<vmem>>, vector<64x256xbf16>
    %cst = arith.constant dense<0.000000e+00> : vector<1x256xf32>
    %8 = tpu.matmul %6, %7, %cst {dimension_numbers = #tpu.dot_dimension_numbers<[1], [0], [0], [1], [0, 0, 1, 1], [], []>} : vector<1x64xbf16>, vector<64x256xbf16>, vector<1x256xf32> -> vector<1x256xf32>
    %c0_6 = arith.constant 0 : index
    %c0_7 = arith.constant 0 : index
    %9 = vector.load %arg4[%c0_6, %c0_7] : memref<1x256xf32, #tpu.memory_space<vmem>>, vector<1x256xf32>
    %10 = arith.addf %8, %9 : vector<1x256xf32>
    %c256_i32 = arith.constant 256 : i32
    %11 = arith.muli %arg0, %c256_i32 : i32
    %12 = tpu.assume_multiple %11, 128 : i32
    %c0_8 = arith.constant 0 : index
    %13 = arith.index_cast %12 : i32 to index
    %14 = vector.load %arg12[%c0_8, %13] : memref<1x1024xf32, #tpu.memory_space<vmem>>, vector<1x256xf32>
    tpu.vector_store %arg12[%c0_8, %13], %10 {strides = array<i32>} : memref<1x1024xf32, #tpu.memory_space<vmem>>, vector<1x256xf32>,
    %c0_9 = arith.constant 0 : index
    %c0_10 = arith.constant 0 : index
    %15 = vector.load %arg15[%c0_9, %c0_10] : memref<1x1xf32, #tpu.memory_space<vmem>>, vector<1x1xf32>
    %cst_11 = arith.constant dense<0xFF800000> : vector<1xf32>
    %16 = vector.multi_reduction <maximumf>, %10, %cst_11 [1] : vector<1x256xf32> to vector<1xf32>
    %17 = vector.shape_cast %16 : vector<1xf32> to vector<1x1xf32>
    %18 = arith.maximumf %15, %17 : vector<1x1xf32>
    %19 = arith.subf %15, %18 : vector<1x1xf32>
    %20 = math.exp %19 : vector<1x1xf32>
    %21 = vector.broadcast %18 : vector<1x1xf32> to vector<1x256xf32>
    %22 = arith.subf %10, %21 : vector<1x256xf32>
    %23 = math.exp %22 : vector<1x256xf32>
    %c0_12 = arith.constant 0 : index
    %c0_13 = arith.constant 0 : index
    %24 = vector.load %arg16[%c0_12, %c0_13] : memref<1x1xf32, #tpu.memory_space<vmem>>, vector<1x1xf32>
    %25 = arith.mulf %20, %24 : vector<1x1xf32>
    %cst_14 = arith.constant dense<0.000000e+00> : vector<1xf32>
    %26 = vector.multi_reduction <add>, %23, %cst_14 [1] : vector<1x256xf32> to vector<1xf32>
    %27 = vector.shape_cast %26 : vector<1xf32> to vector<1x1xf32>
    %28 = arith.addf %25, %27 : vector<1x1xf32>
    %c0_15 = arith.constant 0 : index
    %c0_16 = arith.constant 0 : index
    %29 = vector.load %arg16[%c0_15, %c0_16] : memref<1x1xf32, #tpu.memory_space<vmem>>, vector<1x1xf32>
    tpu.vector_store %arg16[%c0_15, %c0_16], %28 {strides = array<i32>} : memref<1x1xf32, #tpu.memory_space<vmem>>, vector<1x1xf32>,
    %c0_17 = arith.constant 0 : index
    %c0_18 = arith.constant 0 : index
    %30 = vector.load %arg17[%c0_17, %c0_18] : memref<1x32xf32, #tpu.memory_space<vmem>>, vector<1x32xf32>
    %31 = vector.broadcast %20 : vector<1x1xf32> to vector<1x32xf32>
    %32 = arith.mulf %31, %30 : vector<1x32xf32>
    %33 = arith.truncf %23 : vector<1x256xf32> to vector<1x256xbf16>
    %c0_19 = arith.constant 0 : index
    %c0_20 = arith.constant 0 : index
    %34 = vector.load %arg5[%c0_19, %c0_20] : memref<32x256xbf16, #tpu.memory_space<vmem>>, vector<32x256xbf16>
    %cst_21 = arith.constant dense<0.000000e+00> : vector<1x32xf32>
    %35 = tpu.matmul %33, %34, %cst_21 {dimension_numbers = #tpu.dot_dimension_numbers<[1], [1], [0], [0], [0, 0, 1, 0], [], []>} : vector<1x256xbf16>, vector<32x256xbf16>, vector<1x32xf32> -> vector<1x32xf32>
    %36 = arith.addf %32, %35 : vector<1x32xf32>
    %c0_22 = arith.constant 0 : index
    %c0_23 = arith.constant 0 : index
    %37 = vector.load %arg17[%c0_22, %c0_23] : memref<1x32xf32, #tpu.memory_space<vmem>>, vector<1x32xf32>
    tpu.vector_store %arg17[%c0_22, %c0_23], %36 {strides = array<i32>} : memref<1x32xf32, #tpu.memory_space<vmem>>, vector<1x32xf32>,
    %c0_24 = arith.constant 0 : index
    %c0_25 = arith.constant 0 : index
    %38 = vector.load %arg15[%c0_24, %c0_25] : memref<1x1xf32, #tpu.memory_space<vmem>>, vector<1x1xf32>
    tpu.vector_store %arg15[%c0_24, %c0_25], %18 {strides = array<i32>} : memref<1x1xf32, #tpu.memory_space<vmem>>, vector<1x1xf32>,
    %c3_i32 = arith.constant 3 : i32
    %39 = arith.cmpi eq, %arg0, %c3_i32 : i32
    %40 = arith.extui %39 : i1 to i32
    %c0_i32_26 = arith.constant 0 : i32
    %41 = arith.cmpi ne, %40, %c0_i32_26 : i32
    scf.if %41 {
      %c0_27 = arith.constant 0 : index
      %c0_28 = arith.constant 0 : index
      %42 = vector.load %arg16[%c0_27, %c0_28] : memref<1x1xf32, #tpu.memory_space<vmem>>, vector<1x1xf32>
      %cst_29 = arith.constant 1.000000e+00 : f32
      %43 = vector.broadcast %cst_29 : f32 to vector<1x1xf32>
      %44 = arith.divf %43, %42 : vector<1x1xf32>
      %c0_30 = arith.constant 0 : index
      %c0_31 = arith.constant 0 : index
      %45 = vector.load %arg12[%c0_30, %c0_31] : memref<1x1024xf32, #tpu.memory_space<vmem>>, vector<1x1024xf32>
      %c0_32 = arith.constant 0 : index
      %c0_33 = arith.constant 0 : index
      %46 = vector.load %arg15[%c0_32, %c0_33] : memref<1x1xf32, #tpu.memory_space<vmem>>, vector<1x1xf32>
      %47 = vector.broadcast %46 : vector<1x1xf32> to vector<1x1024xf32>
      %48 = arith.subf %45, %47 : vector<1x1024xf32>
      %49 = math.exp %48 : vector<1x1024xf32>
      %50 = vector.broadcast %44 : vector<1x1xf32> to vector<1x1024xf32>
      %51 = arith.mulf %49, %50 : vector<1x1024xf32>
      %c0_34 = arith.constant 0 : index
      %c0_35 = arith.constant 0 : index
      %52 = vector.load %arg12[%c0_34, %c0_35] : memref<1x1024xf32, #tpu.memory_space<vmem>>, vector<1x1024xf32>
      tpu.vector_store %arg12[%c0_34, %c0_35], %51 {strides = array<i32>} : memref<1x1024xf32, #tpu.memory_space<vmem>>, vector<1x1024xf32>,
      %c0_36 = arith.constant 0 : index
      %c0_37 = arith.constant 0 : index
      %53 = vector.load %arg17[%c0_36, %c0_37] : memref<1x32xf32, #tpu.memory_space<vmem>>, vector<1x32xf32>
      %54 = vector.broadcast %44 : vector<1x1xf32> to vector<1x32xf32>
      %55 = arith.mulf %53, %54 : vector<1x32xf32>
      %56 = tpu.concatenate %3, %55 in 1 : vector<1x32xf32>, vector<1x32xf32> -> vector<1x64xf32>
      %c0_38 = arith.constant 0 : index
      %c0_39 = arith.constant 0 : index
      %57 = vector.load %arg6[%c0_38, %c0_39] : memref<64x32xf32, #tpu.memory_space<vmem>>, vector<64x32xf32>
      %cst_40 = arith.constant dense<0.000000e+00> : vector<1x32xf32>
      %58 = tpu.matmul %56, %57, %cst_40 {dimension_numbers = #tpu.dot_dimension_numbers<[1], [0], [0], [1], [0, 0, 1, 1], [], []>} : vector<1x64xf32>, vector<64x32xf32>, vector<1x32xf32> -> vector<1x32xf32>
      %c0_41 = arith.constant 0 : index
      %c0_42 = arith.constant 0 : index
      %59 = vector.load %arg7[%c0_41, %c0_42] : memref<1x32xf32, #tpu.memory_space<vmem>>, vector<1x32xf32>
      %60 = arith.addf %58, %59 : vector<1x32xf32>
      %cst_43 = arith.constant 0.000000e+00 : f32
      %61 = vector.broadcast %cst_43 : f32 to vector<1x32xf32>
      %62 = arith.maximumf %60, %61 : vector<1x32xf32>
      %c0_44 = arith.constant 0 : index
      %c0_45 = arith.constant 0 : index
      %63 = vector.load %arg8[%c0_44, %c0_45] : memref<32x96xf32, #tpu.memory_space<vmem>>, vector<32x96xf32>
      %cst_46 = arith.constant dense<0.000000e+00> : vector<1x96xf32>
      %64 = tpu.matmul %62, %63, %cst_46 {dimension_numbers = #tpu.dot_dimension_numbers<[1], [0], [0], [1], [0, 0, 1, 1], [], []>} : vector<1x32xf32>, vector<32x96xf32>, vector<1x96xf32> -> vector<1x96xf32>
      %c0_47 = arith.constant 0 : index
      %c0_48 = arith.constant 0 : index
      %65 = vector.load %arg9[%c0_47, %c0_48] : memref<1x96xf32, #tpu.memory_space<vmem>>, vector<1x96xf32>
      %66 = arith.addf %64, %65 : vector<1x96xf32>
      %c0_49 = arith.constant 0 : index
      %c0_50 = arith.constant 0 : index
      %67 = vector.load %arg10[%c0_49, %c0_50] : memref<32x96xf32, #tpu.memory_space<vmem>>, vector<32x96xf32>
      %cst_51 = arith.constant dense<0.000000e+00> : vector<1x96xf32>
      %68 = tpu.matmul %4, %67, %cst_51 {dimension_numbers = #tpu.dot_dimension_numbers<[1], [0], [0], [1], [0, 0, 1, 1], [], []>} : vector<1x32xf32>, vector<32x96xf32>, vector<1x96xf32> -> vector<1x96xf32>
      %c0_52 = arith.constant 0 : index
      %c0_53 = arith.constant 0 : index
      %69 = vector.load %arg11[%c0_52, %c0_53] : memref<1x96xf32, #tpu.memory_space<vmem>>, vector<1x96xf32>
      %70 = arith.addf %68, %69 : vector<1x96xf32>
      %71 = vector.extract_strided_slice %66 {offsets = [0, 0], sizes = [1, 32], strides = [1, 1]} : vector<1x96xf32> to vector<1x32xf32>
      %72 = vector.extract_strided_slice %70 {offsets = [0, 0], sizes = [1, 32], strides = [1, 1]} : vector<1x96xf32> to vector<1x32xf32>
      %73 = arith.addf %71, %72 : vector<1x32xf32>
      %74 = arith.negf %73 : vector<1x32xf32>
      %75 = math.exp %74 : vector<1x32xf32>
      %cst_54 = arith.constant 1.000000e+00 : f32
      %76 = vector.broadcast %cst_54 : f32 to vector<1x32xf32>
      %77 = arith.addf %76, %75 : vector<1x32xf32>
      %78 = arith.divf %76, %77 : vector<1x32xf32>
      %79 = vector.extract_strided_slice %66 {offsets = [0, 32], sizes = [1, 32], strides = [1, 1]} : vector<1x96xf32> to vector<1x32xf32>
      %80 = vector.extract_strided_slice %70 {offsets = [0, 32], sizes = [1, 32], strides = [1, 1]} : vector<1x96xf32> to vector<1x32xf32>
      %81 = arith.addf %79, %80 : vector<1x32xf32>
      %82 = arith.negf %81 : vector<1x32xf32>
      %83 = math.exp %82 : vector<1x32xf32>
      %cst_55 = arith.constant 1.000000e+00 : f32
      %84 = vector.broadcast %cst_55 : f32 to vector<1x32xf32>
      %85 = arith.addf %84, %83 : vector<1x32xf32>
      %86 = arith.divf %84, %85 : vector<1x32xf32>
      %87 = vector.extract_strided_slice %66 {offsets = [0, 64], sizes = [1, 32], strides = [1, 1]} : vector<1x96xf32> to vector<1x32xf32>
      %88 = vector.extract_strided_slice %70 {offsets = [0, 64], sizes = [1, 32], strides = [1, 1]} : vector<1x96xf32> to vector<1x32xf32>
      %89 = arith.mulf %78, %88 : vector<1x32xf32>
      %90 = arith.addf %87, %89 : vector<1x32xf32>
      %91 = math.tanh %90 : vector<1x32xf32>
      %cst_56 = arith.constant 1.000000e+00 : f32
      %92 = vector.broadcast %cst_56 : f32 to vector<1x32xf32>
      %93 = arith.subf %92, %86 : vector<1x32xf32>
      %94 = arith.mulf %93, %91 : vector<1x32xf32>
      %95 = arith.mulf %86, %4 : vector<1x32xf32>
      %96 = arith.addf %94, %95 : vector<1x32xf32>
      %c0_57 = arith.constant 0 : index
      %c0_58 = arith.constant 0 : index
      %97 = vector.load %arg13[%c0_57, %c0_58] : memref<1x32xf32, #tpu.memory_space<vmem>>, vector<1x32xf32>
      tpu.vector_store %arg13[%c0_57, %c0_58], %96 {strides = array<i32>} : memref<1x32xf32, #tpu.memory_space<vmem>>, vector<1x32xf32>,
      %98 = arith.truncf %96 : vector<1x32xf32> to vector<1x32xbf16>
      %c0_59 = arith.constant 0 : index
      %c0_60 = arith.constant 0 : index
      %99 = vector.load %arg14[%c0_59, %c0_60] : memref<1x32xbf16, #tpu.memory_space<vmem>>, vector<1x32xbf16>
      tpu.vector_store %arg14[%c0_59, %c0_60], %98 {strides = array<i32>} : memref<1x32xbf16, #tpu.memory_space<vmem>>, vector<1x32xbf16>,
    } else {
    }
    return
  }
  func.func @transform_0(%arg0: i32) -> (i32, i32) {
    %c0_i32 = arith.constant 0 : i32
    %c0_i32_0 = arith.constant 0 : i32
    %c0_i32_1 = arith.constant 0 : i32
    return %c0_i32, %c0_i32_0 : i32, i32
  }
  func.func @transform_1(%arg0: i32) -> (i32, i32) {
    %c0_i32 = arith.constant 0 : i32
    %c0_i32_0 = arith.constant 0 : i32
    %c0_i32_1 = arith.constant 0 : i32
    return %c0_i32, %c0_i32_0 : i32, i32
  }
  func.func @transform_2(%arg0: i32) -> (i32, i32) {
    %c0_i32 = arith.constant 0 : i32
    %c0_i32_0 = arith.constant 0 : i32
    return %c0_i32, %arg0 : i32, i32
  }
  func.func @transform_3(%arg0: i32) -> (i32, i32) {
    %c0_i32 = arith.constant 0 : i32
    %c0_i32_0 = arith.constant 0 : i32
    return %c0_i32, %arg0 : i32, i32
  }
  func.func @transform_4(%arg0: i32) -> (i32, i32) {
    %c0_i32 = arith.constant 0 : i32
    %c0_i32_0 = arith.constant 0 : i32
    return %c0_i32, %arg0 : i32, i32
  }
  func.func @transform_5(%arg0: i32) -> (i32, i32) {
    %c0_i32 = arith.constant 0 : i32
    %c0_i32_0 = arith.constant 0 : i32
    %c0_i32_1 = arith.constant 0 : i32
    return %c0_i32, %c0_i32_0 : i32, i32
  }
  func.func @transform_6(%arg0: i32) -> (i32, i32) {
    %c0_i32 = arith.constant 0 : i32
    %c0_i32_0 = arith.constant 0 : i32
    %c0_i32_1 = arith.constant 0 : i32
    return %c0_i32, %c0_i32_0 : i32, i32
  }
  func.func @transform_7(%arg0: i32) -> (i32, i32) {
    %c0_i32 = arith.constant 0 : i32
    %c0_i32_0 = arith.constant 0 : i32
    %c0_i32_1 = arith.constant 0 : i32
    return %c0_i32, %c0_i32_0 : i32, i32
  }
  func.func @transform_8(%arg0: i32) -> (i32, i32) {
    %c0_i32 = arith.constant 0 : i32
    %c0_i32_0 = arith.constant 0 : i32
    %c0_i32_1 = arith.constant 0 : i32
    return %c0_i32, %c0_i32_0 : i32, i32
  }
  func.func @transform_9(%arg0: i32) -> (i32, i32) {
    %c0_i32 = arith.constant 0 : i32
    %c0_i32_0 = arith.constant 0 : i32
    %c0_i32_1 = arith.constant 0 : i32
    return %c0_i32, %c0_i32_0 : i32, i32
  }
  func.func @transform_10(%arg0: i32) -> (i32, i32) {
    %c0_i32 = arith.constant 0 : i32
    %c0_i32_0 = arith.constant 0 : i32
    %c0_i32_1 = arith.constant 0 : i32
    return %c0_i32, %c0_i32_0 : i32, i32
  }
  func.func @transform_11(%arg0: i32) -> (i32, i32) {
    %c0_i32 = arith.constant 0 : i32
    %c0_i32_0 = arith.constant 0 : i32
    %c0_i32_1 = arith.constant 0 : i32
    return %c0_i32, %c0_i32_0 : i32, i32
  }
  func.func @transform_12(%arg0: i32) -> (i32, i32) {
    %c0_i32 = arith.constant 0 : i32
    %c0_i32_0 = arith.constant 0 : i32
    %c0_i32_1 = arith.constant 0 : i32
    return %c0_i32, %c0_i32_0 : i32, i32
  }
  func.func @transform_13(%arg0: i32) -> (i32, i32) {
    %c0_i32 = arith.constant 0 : i32
    %c0_i32_0 = arith.constant 0 : i32
    %c0_i32_1 = arith.constant 0 : i32
    return %c0_i32, %c0_i32_0 : i32, i32
  }
}

</mosaic_0001>

<llo_original>
// kernel: tpu_custom_call.1
$region0: #{tpu_custom_call.1}
  #allocation0 [shape = 'u32[]', space=smem, size = 0x4, offset = 0x4, fixed_abs, tag = 'smem constant byte address 0x4 - core index']
  #allocation1 [shape = 'u32[144,128]{1,0:T(1,128)}', space=vmem, size = 0x12000, scoped, tag = 'internal scratch']
  #allocation2 [shape = 'f32[1,1]{1,0:T(1,128)}', space=vmem, size = 0x200, scoped, tag = 'scratch operand']
  #allocation3 [shape = 'f32[1,1]{1,0:T(1,128)}', space=vmem, size = 0x200, scoped, tag = 'scratch operand']
  #allocation4 [shape = 'f32[1,32]{1,0:T(1,128)}', space=vmem, size = 0x200, scoped, tag = 'scratch operand']
  %s0 = inlined_call_operand.vmem [shape: f32[1,32], index: 0, kind: input, shape index: {}]
  %s1 = inlined_call_operand.vmem [shape: f32[1,32], index: 1, kind: input, shape index: {}]
  %s2 = inlined_call_operand.hbm [shape: bf16[64,1024], index: 2, kind: input, shape index: {}]
  %s3 = inlined_call_operand.vmem [shape: f32[1,1024], index: 3, kind: input, shape index: {}]
  %s4 = inlined_call_operand.hbm [shape: bf16[32,1024], index: 4, kind: input, shape index: {}]
  %s5 = inlined_call_operand.vmem [shape: f32[64,32], index: 5, kind: input, shape index: {}]
  %s6 = inlined_call_operand.vmem [shape: f32[1,32], index: 6, kind: input, shape index: {}]
  %s7 = inlined_call_operand.vmem [shape: f32[32,96], index: 7, kind: input, shape index: {}]
  %s8 = inlined_call_operand.vmem [shape: f32[1,96], index: 8, kind: input, shape index: {}]
  %s9 = inlined_call_operand.vmem [shape: f32[32,96], index: 9, kind: input, shape index: {}]
  %s10 = inlined_call_operand.vmem [shape: f32[1,96], index: 10, kind: input, shape index: {}]
  %s11 = inlined_call_operand.hbm [shape: f32[1,1024], index: 11, kind: output, shape index: {0}]
  %s12 = inlined_call_operand.hbm [shape: f32[1,32], index: 12, kind: output, shape index: {1}]
  %s13 = inlined_call_operand.hbm [shape: bf16[1,32], index: 13, kind: output, shape index: {2}]
  %14 = xla_tuple %s11, %s12, %s13
  %s15 = sld [smem:[#allocation0]]
  $region109: #{tpu_custom_call.1} parent=0
    _
  %s17 = ssub.s32 1, %s15
  %s18 = scalar_select 0, %s17, %s15
  $region1: #{tpu_custom_call.1} parent=0
    #allocation5 [shape = 'u8[65536]{0}', space=vmem, size = 0x10000, scoped, tag = 'input window, operand 2']
    #allocation6 [shape = 's32[2]{0}', space=sflag, size = 0x8, scoped, tag = 'scoped memory for tpu_custom_call.1']
    #allocation7 [shape = 's32[2]{0}', space=sflag, size = 0x8, scoped, tag = 'scoped memory for tpu_custom_call.1']
    #allocation8 [shape = 'u8[32768]{0}', space=vmem, size = 0x8000, scoped, tag = 'input window, operand 4']
    #allocation9 [shape = 's32[2]{0}', space=sflag, size = 0x8, scoped, tag = 'scoped memory for tpu_custom_call.1']
    #allocation10 [shape = 'u8[4096]{0}', space=vmem, size = 0x1000, scoped, tag = 'output window, operand 0, single buffered']
    #allocation11 [shape = 'u8[512]{0}', space=vmem, size = 0x400, scoped, tag = 'output window, operand 1, single buffered']
    #allocation12 [shape = 's32[1]{0}', space=sflag, size = 0x4, scoped, tag = 'scoped memory for tpu_custom_call.1']
    #allocation13 [shape = 'u8[512]{0}', space=vmem, size = 0x400, scoped, tag = 'output window, operand 2, single buffered']
    %19 = vsyncpa [#allocation6], 0
    %s20 = scalar_lea.sflag [#allocation6], 1
    %21 = vsyncpa %s20, 0
    %22 = vsyncpa [#allocation9], 0
    %s23 = scalar_lea.sflag [#allocation9], 1
    %24 = vsyncpa %s23, 0
    %25 = vsyncpa [#allocation7], 0
    %26 = vsyncpa [#allocation12], 0
    loop: start=0, step=1, limit=6
    $region2: #{tpu_custom_call.1} parent=1 // loop_pre_header
      _
    $region3: #{tpu_custom_call.1} parent=1 // loop_header
      %s28 = sphi 0, %s32
      %p29 = scmp.ge.s32.totalorder %s28, 6
      %s36 = sphi 0, %s36
      %s38 = sphi 0, %s36
      %s39 = sphi 0, %s38
      %s53 = sphi 0, %s39
      %s57 = sphi 0, %s57
      %s59 = sphi 0, %s57
      %s60 = sphi 0, %s59
      %s74 = sphi 0, %s60
      %s80 = sphi 0, %s82
      %s83 = sphi 0, %s80
      %s84 = sphi 0, %s83
      %s100 = sphi 0, %s84
      %s106 = sphi 0, %s108
      %s109 = sphi 0, %s106
      %s110 = sphi 0, %s109
      %s126 = sphi 0, %s110
      %s132 = sphi 0, %s134
      %s135 = sphi 0, %s132
      %s136 = sphi 0, %s135
      %s152 = sphi 0, %s136
      %s156 = sphi 0, %s156
      %s158 = sphi 0, %s156
      %s159 = sphi 0, %s158
      %s173 = sphi 0, %s159
      %s177 = sphi 0, %s177
      %s179 = sphi 0, %s177
      %s180 = sphi 0, %s179
      %s194 = sphi 0, %s180
      %s198 = sphi 0, %s198
      %s200 = sphi 0, %s198
      %s201 = sphi 0, %s200
      %s215 = sphi 0, %s201
      %s219 = sphi 0, %s219
      %s221 = sphi 0, %s219
      %s222 = sphi 0, %s221
      %s236 = sphi 0, %s222
      %s240 = sphi 0, %s240
      %s242 = sphi 0, %s240
      %s243 = sphi 0, %s242
      %s257 = sphi 0, %s243
      %s261 = sphi 0, %s261
      %s263 = sphi 0, %s261
      %s264 = sphi 0, %s263
      %s278 = sphi 0, %s264
      %s282 = sphi 0, %s282
      %s284 = sphi 0, %s282
      %s285 = sphi 0, %s284
      %s299 = sphi 0, %s285
      %s303 = sphi 0, %s303
      %s305 = sphi 0, %s303
      %s306 = sphi 0, %s305
      %s320 = sphi 0, %s306
      %s324 = sphi 0, %s324
      %s326 = sphi 0, %s324
      %s327 = sphi 0, %s326
      %s341 = sphi 0, %s327
    $region4: #{tpu_custom_call.1} parent=1 // loop_header_branch
      %31 = sbr.rel (%p29) target = $region8
    $region5: #{tpu_custom_call.1} parent=1 // loop_body
      %s33 = ssub.s32 %s28, 1
      %s34 = ssub.s32 %s28, 2
      %s35 = sadd.s32 %s28, 1
      %s37 = sadd.s32 %s36, 1
      %p40 = scmp.eq.s32.totalorder %s28, 3
      %p41 = scmp.ne.s32.totalorder %s36, %s38
      %p42 = scmp.eq.s32.totalorder %s28, 0
      %p43 = por %p41, %p42
      %p44 = scmp.ne.s32.totalorder %s36, %s38
      %p45 = scmp.eq.s32.totalorder %s33, 3
      %p46 = por %p44, %p45
      %p47 = scmp.ne.s32.totalorder %s38, %s39
      %p48 = scmp.eq.s32.totalorder %s33, 0
      %p49 = por %p47, %p48
      %p50 = scmp.ne.s32.totalorder %s38, %s39
      %p51 = scmp.eq.s32.totalorder %s34, 3
      %p52 = por %p50, %p51
      %p54 = scmp.ne.s32.totalorder %s39, %s53
      %p55 = scmp.eq.s32.totalorder %s34, 0
      %p56 = por %p54, %p55
      %s58 = sadd.s32 %s57, 1
      %p61 = scmp.eq.s32.totalorder %s28, 3
      %p62 = scmp.ne.s32.totalorder %s57, %s59
      %p63 = scmp.eq.s32.totalorder %s28, 0
      %p64 = por %p62, %p63
      %p65 = scmp.ne.s32.totalorder %s57, %s59
      %p66 = scmp.eq.s32.totalorder %s33, 3
      %p67 = por %p65, %p66
      %p68 = scmp.ne.s32.totalorder %s59, %s60
      %p69 = scmp.eq.s32.totalorder %s33, 0
      %p70 = por %p68, %p69
      %p71 = scmp.ne.s32.totalorder %s59, %s60
      %p72 = scmp.eq.s32.totalorder %s34, 3
      %p73 = por %p71, %p72
      %p75 = scmp.ne.s32.totalorder %s60, %s74
      %p76 = scmp.eq.s32.totalorder %s34, 0
      %p77 = por %p75, %p76
      %s78 = ssub.s32 %s28, %s35
      %p79 = scmp.eq.s32.totalorder %s78, 0
      %s81 = sadd.s32 %s80, 1
      %s82 = scalar_select %p79, %s80, %s81
      %p85 = pneg %p79
      %p86 = scmp.eq.s32.totalorder %s28, 3
      %p87 = por %p85, %p86
      %p88 = scmp.ne.s32.totalorder %s80, %s83
      %p89 = scmp.eq.s32.totalorder %s28, 0
      %p90 = por %p88, %p89
      %p91 = scmp.ne.s32.totalorder %s80, %s83
      %p92 = scmp.eq.s32.totalorder %s33, 3
      %p93 = por %p91, %p92
      %p94 = scmp.ne.s32.totalorder %s83, %s84
      %p95 = scmp.eq.s32.totalorder %s33, 0
      %p96 = por %p94, %p95
      %p97 = scmp.ne.s32.totalorder %s83, %s84
      %p98 = scmp.eq.s32.totalorder %s34, 3
      %p99 = por %p97, %p98
      %p101 = scmp.ne.s32.totalorder %s84, %s100
      %p102 = scmp.eq.s32.totalorder %s34, 0
      %p103 = por %p101, %p102
      %s104 = ssub.s32 %s28, %s35
      %p105 = scmp.eq.s32.totalorder %s104, 0
      %s107 = sadd.s32 %s106, 1
      %s108 = scalar_select %p105, %s106, %s107
      %p111 = pneg %p105
      %p112 = scmp.eq.s32.totalorder %s28, 3
      %p113 = por %p111, %p112
      %p114 = scmp.ne.s32.totalorder %s106, %s109
      %p115 = scmp.eq.s32.totalorder %s28, 0
      %p116 = por %p114, %p115
      %p117 = scmp.ne.s32.totalorder %s106, %s109
      %p118 = scmp.eq.s32.totalorder %s33, 3
      %p119 = por %p117, %p118
      %p120 = scmp.ne.s32.totalorder %s109, %s110
      %p121 = scmp.eq.s32.totalorder %s33, 0
      %p122 = por %p120, %p121
      %p123 = scmp.ne.s32.totalorder %s109, %s110
      %p124 = scmp.eq.s32.totalorder %s34, 3
      %p125 = por %p123, %p124
      %p127 = scmp.ne.s32.totalorder %s110, %s126
      %p128 = scmp.eq.s32.totalorder %s34, 0
      %p129 = por %p127, %p128
      %s130 = ssub.s32 %s28, %s35
      %p131 = scmp.eq.s32.totalorder %s130, 0
      %s133 = sadd.s32 %s132, 1
      %s134 = scalar_select %p131, %s132, %s133
      %p137 = pneg %p131
      %p138 = scmp.eq.s32.totalorder %s28, 3
      %p139 = por %p137, %p138
      %p140 = scmp.ne.s32.totalorder %s132, %s135
      %p141 = scmp.eq.s32.totalorder %s28, 0
      %p142 = por %p140, %p141
      %p143 = scmp.ne.s32.totalorder %s132, %s135
      %p144 = scmp.eq.s32.totalorder %s33, 3
      %p145 = por %p143, %p144
      %p146 = scmp.ne.s32.totalorder %s135, %s136
      %p147 = scmp.eq.s32.totalorder %s33, 0
      %p148 = por %p146, %p147
      %p149 = scmp.ne.s32.totalorder %s135, %s136
      %p150 = scmp.eq.s32.totalorder %s34, 3
      %p151 = por %p149, %p150
      %p153 = scmp.ne.s32.totalorder %s136, %s152
      %p154 = scmp.eq.s32.totalorder %s34, 0
      %p155 = por %p153, %p154
      %s157 = sadd.s32 %s156, 1
      %p160 = scmp.eq.s32.totalorder %s28, 3
      %p161 = scmp.ne.s32.totalorder %s156, %s158
      %p162 = scmp.eq.s32.totalorder %s28, 0
      %p163 = por %p161, %p162
      %p164 = scmp.ne.s32.totalorder %s156, %s158
      %p165 = scmp.eq.s32.totalorder %s33, 3
      %p166 = por %p164, %p165
      %p167 = scmp.ne.s32.totalorder %s158, %s159
      %p168 = scmp.eq.s32.totalorder %s33, 0
      %p169 = por %p167, %p168
      %p170 = scmp.ne.s32.totalorder %s158, %s159
      %p171 = scmp.eq.s32.totalorder %s34, 3
      %p172 = por %p170, %p171
      %p174 = scmp.ne.s32.totalorder %s159, %s173
      %p175 = scmp.eq.s32.totalorder %s34, 0
      %p176 = por %p174, %p175
      %s178 = sadd.s32 %s177, 1
      %p181 = scmp.eq.s32.totalorder %s28, 3
      %p182 = scmp.ne.s32.totalorder %s177, %s179
      %p183 = scmp.eq.s32.totalorder %s28, 0
      %p184 = por %p182, %p183
      %p185 = scmp.ne.s32.totalorder %s177, %s179
      %p186 = scmp.eq.s32.totalorder %s33, 3
      %p187 = por %p185, %p186
      %p188 = scmp.ne.s32.totalorder %s179, %s180
      %p189 = scmp.eq.s32.totalorder %s33, 0
      %p190 = por %p188, %p189
      %p191 = scmp.ne.s32.totalorder %s179, %s180
      %p192 = scmp.eq.s32.totalorder %s34, 3
      %p193 = por %p191, %p192
      %p195 = scmp.ne.s32.totalorder %s180, %s194
      %p196 = scmp.eq.s32.totalorder %s34, 0
      %p197 = por %p195, %p196
      %s199 = sadd.s32 %s198, 1
      %p202 = scmp.eq.s32.totalorder %s28, 3
      %p203 = scmp.ne.s32.totalorder %s198, %s200
      %p204 = scmp.eq.s32.totalorder %s28, 0
      %p205 = por %p203, %p204
      %p206 = scmp.ne.s32.totalorder %s198, %s200
      %p207 = scmp.eq.s32.totalorder %s33, 3
      %p208 = por %p206, %p207
      %p209 = scmp.ne.s32.totalorder %s200, %s201
      %p210 = scmp.eq.s32.totalorder %s33, 0
      %p211 = por %p209, %p210
      %p212 = scmp.ne.s32.totalorder %s200, %s201
      %p213 = scmp.eq.s32.totalorder %s34, 3
      %p214 = por %p212, %p213
      %p216 = scmp.ne.s32.totalorder %s201, %s215
      %p217 = scmp.eq.s32.totalorder %s34, 0
      %p218 = por %p216, %p217
      %s220 = sadd.s32 %s219, 1
      %p223 = scmp.eq.s32.totalorder %s28, 3
      %p224 = scmp.ne.s32.totalorder %s219, %s221
      %p225 = scmp.eq.s32.totalorder %s28, 0
      %p226 = por %p224, %p225
      %p227 = scmp.ne.s32.totalorder %s219, %s221
      %p228 = scmp.eq.s32.totalorder %s33, 3
      %p229 = por %p227, %p228
      %p230 = scmp.ne.s32.totalorder %s221, %s222
      %p231 = scmp.eq.s32.totalorder %s33, 0
      %p232 = por %p230, %p231
      %p233 = scmp.ne.s32.totalorder %s221, %s222
      %p234 = scmp.eq.s32.totalorder %s34, 3
      %p235 = por %p233, %p234
      %p237 = scmp.ne.s32.totalorder %s222, %s236
      %p238 = scmp.eq.s32.totalorder %s34, 0
      %p239 = por %p237, %p238
      %s241 = sadd.s32 %s240, 1
      %p244 = scmp.eq.s32.totalorder %s28, 3
      %p245 = scmp.ne.s32.totalorder %s240, %s242
      %p246 = scmp.eq.s32.totalorder %s28, 0
      %p247 = por %p245, %p246
      %p248 = scmp.ne.s32.totalorder %s240, %s242
      %p249 = scmp.eq.s32.totalorder %s33, 3
      %p250 = por %p248, %p249
      %p251 = scmp.ne.s32.totalorder %s242, %s243
      %p252 = scmp.eq.s32.totalorder %s33, 0
      %p253 = por %p251, %p252
      %p254 = scmp.ne.s32.totalorder %s242, %s243
      %p255 = scmp.eq.s32.totalorder %s34, 3
      %p256 = por %p254, %p255
      %p258 = scmp.ne.s32.totalorder %s243, %s257
      %p259 = scmp.eq.s32.totalorder %s34, 0
      %p260 = por %p258, %p259
      %s262 = sadd.s32 %s261, 1
      %p265 = scmp.eq.s32.totalorder %s28, 3
      %p266 = scmp.ne.s32.totalorder %s261, %s263
      %p267 = scmp.eq.s32.totalorder %s28, 0
      %p268 = por %p266, %p267
      %p269 = scmp.ne.s32.totalorder %s261, %s263
      %p270 = scmp.eq.s32.totalorder %s33, 3
      %p271 = por %p269, %p270
      %p272 = scmp.ne.s32.totalorder %s263, %s264
      %p273 = scmp.eq.s32.totalorder %s33, 0
      %p274 = por %p272, %p273
      %p275 = scmp.ne.s32.totalorder %s263, %s264
      %p276 = scmp.eq.s32.totalorder %s34, 3
      %p277 = por %p275, %p276
      %p279 = scmp.ne.s32.totalorder %s264, %s278
      %p280 = scmp.eq.s32.totalorder %s34, 0
      %p281 = por %p279, %p280
      %s283 = sadd.s32 %s282, 1
      %p286 = scmp.eq.s32.totalorder %s28, 3
      %p287 = scmp.ne.s32.totalorder %s282, %s284
      %p288 = scmp.eq.s32.totalorder %s28, 0
      %p289 = por %p287, %p288
      %p290 = scmp.ne.s32.totalorder %s282, %s284
      %p291 = scmp.eq.s32.totalorder %s33, 3
      %p292 = por %p290, %p291
      %p293 = scmp.ne.s32.totalorder %s284, %s285
      %p294 = scmp.eq.s32.totalorder %s33, 0
      %p295 = por %p293, %p294
      %p296 = scmp.ne.s32.totalorder %s284, %s285
      %p297 = scmp.eq.s32.totalorder %s34, 3
      %p298 = por %p296, %p297
      %p300 = scmp.ne.s32.totalorder %s285, %s299
      %p301 = scmp.eq.s32.totalorder %s34, 0
      %p302 = por %p300, %p301
      %s304 = sadd.s32 %s303, 1
      %p307 = scmp.eq.s32.totalorder %s28, 3
      %p308 = scmp.ne.s32.totalorder %s303, %s305
      %p309 = scmp.eq.s32.totalorder %s28, 0
      %p310 = por %p308, %p309
      %p311 = scmp.ne.s32.totalorder %s303, %s305
      %p312 = scmp.eq.s32.totalorder %s33, 3
      %p313 = por %p311, %p312
      %p314 = scmp.ne.s32.totalorder %s305, %s306
      %p315 = scmp.eq.s32.totalorder %s33, 0
      %p316 = por %p314, %p315
      %p317 = scmp.ne.s32.totalorder %s305, %s306
      %p318 = scmp.eq.s32.totalorder %s34, 3
      %p319 = por %p317, %p318
      %p321 = scmp.ne.s32.totalorder %s306, %s320
      %p322 = scmp.eq.s32.totalorder %s34, 0
      %p323 = por %p321, %p322
      %s325 = sadd.s32 %s324, 1
      %p328 = scmp.eq.s32.totalorder %s28, 3
      %p329 = scmp.ne.s32.totalorder %s324, %s326
      %p330 = scmp.eq.s32.totalorder %s28, 0
      %p331 = por %p329, %p330
      %p332 = scmp.ne.s32.totalorder %s324, %s326
      %p333 = scmp.eq.s32.totalorder %s33, 3
      %p334 = por %p332, %p333
      %p335 = scmp.ne.s32.totalorder %s326, %s327
      %p336 = scmp.eq.s32.totalorder %s33, 0
      %p337 = por %p335, %p336
      %p338 = scmp.ne.s32.totalorder %s326, %s327
      %p339 = scmp.eq.s32.totalorder %s34, 3
      %p340 = por %p338, %p339
      %p342 = scmp.ne.s32.totalorder %s327, %s341
      %p343 = scmp.eq.s32.totalorder %s34, 0
      %p344 = por %p342, %p343
      %p345 = scmp.le.s32.totalorder 1, %s28
      %p346 = scmp.lt.s32.totalorder %s28, 5
      %p347 = pnand %p345, %p346
      %p348 = pneg %p347
      // Predicated region
      $region9: #{tpu_custom_call.1} parent=5 // pred_check
        _
      $region10: #{tpu_custom_call.1} parent=5 // pred_check_branch
        %350 = sbr.rel (%p347) target = $region12
      $region11: #{tpu_custom_call.1} parent=5 // pred_region
        %s351 = ssub.s32 %s28, 1
        // Predicated region
        $region13: #{tpu_custom_call.1} parent=11 // pred_check
          %p352 = pneg %p49
        $region14: #{tpu_custom_call.1} parent=11 // pred_check_branch
          %354 = sbr.rel (%p352) target = $region16
        $region15: #{tpu_custom_call.1} parent=11 // pred_region
          _
        $region16: #{tpu_custom_call.1} parent=11 // pred_fallthru
          _
        // Predicated region
        $region17: #{tpu_custom_call.1} parent=11 // pred_check
          %p355 = pneg %p70
        $region18: #{tpu_custom_call.1} parent=11 // pred_check_branch
          %357 = sbr.rel (%p355) target = $region20
        $region19: #{tpu_custom_call.1} parent=11 // pred_region
          _
        $region20: #{tpu_custom_call.1} parent=11 // pred_fallthru
          _
        // Predicated region
        $region21: #{tpu_custom_call.1} parent=11 // pred_check
          %p358 = pneg %p169
        $region22: #{tpu_custom_call.1} parent=11 // pred_check_branch
          %360 = sbr.rel (%p358) target = $region24
        $region23: #{tpu_custom_call.1} parent=11 // pred_region
          _
        $region24: #{tpu_custom_call.1} parent=11 // pred_fallthru
          _
        // Predicated region
        $region25: #{tpu_custom_call.1} parent=11 // pred_check
          %p361 = pneg %p190
        $region26: #{tpu_custom_call.1} parent=11 // pred_check_branch
          %363 = sbr.rel (%p361) target = $region28
        $region27: #{tpu_custom_call.1} parent=11 // pred_region
          _
        $region28: #{tpu_custom_call.1} parent=11 // pred_fallthru
          _
        // Predicated region
        $region29: #{tpu_custom_call.1} parent=11 // pred_check
          %p364 = pneg %p211
        $region30: #{tpu_custom_call.1} parent=11 // pred_check_branch
          %366 = sbr.rel (%p364) target = $region32
        $region31: #{tpu_custom_call.1} parent=11 // pred_region
          _
        $region32: #{tpu_custom_call.1} parent=11 // pred_fallthru
          _
        // Predicated region
        $region33: #{tpu_custom_call.1} parent=11 // pred_check
          %p367 = pneg %p232
        $region34: #{tpu_custom_call.1} parent=11 // pred_check_branch
          %369 = sbr.rel (%p367) target = $region36
        $region35: #{tpu_custom_call.1} parent=11 // pred_region
          _
        $region36: #{tpu_custom_call.1} parent=11 // pred_fallthru
          _
        // Predicated region
        $region37: #{tpu_custom_call.1} parent=11 // pred_check
          %p370 = pneg %p253
        $region38: #{tpu_custom_call.1} parent=11 // pred_check_branch
          %372 = sbr.rel (%p370) target = $region40
        $region39: #{tpu_custom_call.1} parent=11 // pred_region
          _
        $region40: #{tpu_custom_call.1} parent=11 // pred_fallthru
          _
        // Predicated region
        $region41: #{tpu_custom_call.1} parent=11 // pred_check
          %p373 = pneg %p274
        $region42: #{tpu_custom_call.1} parent=11 // pred_check_branch
          %375 = sbr.rel (%p373) target = $region44
        $region43: #{tpu_custom_call.1} parent=11 // pred_region
          _
        $region44: #{tpu_custom_call.1} parent=11 // pred_fallthru
          _
      $region12: #{tpu_custom_call.1} parent=5 // pred_fallthru
        _
      %p376 = scmp.lt.s32.totalorder %s28, 4
      // Predicated region
      $region45: #{tpu_custom_call.1} parent=5 // pred_check
        %p377 = pneg %p376
      $region46: #{tpu_custom_call.1} parent=5 // pred_check_branch
        %379 = sbr.rel (%p377) target = $region48
      $region47: #{tpu_custom_call.1} parent=5 // pred_region
        // Predicated region
        $region49: #{tpu_custom_call.1} parent=47 // pred_check
          %p380 = pneg %p90
        $region50: #{tpu_custom_call.1} parent=47 // pred_check_branch
          %382 = sbr.rel (%p380) target = $region52
        $region51: #{tpu_custom_call.1} parent=47 // pred_region
          %s383 = sand.u32 %s80, 1
          %s384 = scalar_lea.sflag [#allocation6], %s383
          %s385 = sand.u32 %s80, 1
          %s386 = smul.addr %s385, 64
          %s387 = scalar_lea.vmem [#allocation5], %s386
          %s388 = smul.u32 2, %s28
          %s390 = ssub.s32 1024, 1024
          %391 = vsyncadd %s384, %s390
          %s392 = smul.addr %s388, 64
          %s393 = scalar_lea.hbm %s2, %s392
          %s394 = sshll.u32 %s387, 4
          %s395 = int_to_ptr.vmem [resolvable:$true] %s394
          %400 = dma.hbm_to_vmem [thread:$0]  %s393, 1024, %s395, %s384, 512, 128, 8
        $region52: #{tpu_custom_call.1} parent=47 // pred_fallthru
          _
        // Predicated region
        $region53: #{tpu_custom_call.1} parent=47 // pred_check
          %p401 = pneg %p116
        $region54: #{tpu_custom_call.1} parent=47 // pred_check_branch
          %403 = sbr.rel (%p401) target = $region56
        $region55: #{tpu_custom_call.1} parent=47 // pred_region
          %s404 = smul.u32 2, %s28
          %p405 = scmp.lt.s32.totalorder %s404, 7
          %s406 = scalar_select %p405, %s404, 7
          %s407 = scalar_lea.vmem %s3, %s406
          %s408 = smul.u32 2, %s28
        $region56: #{tpu_custom_call.1} parent=47 // pred_fallthru
          _
        // Predicated region
        $region57: #{tpu_custom_call.1} parent=47 // pred_check
          %p409 = pneg %p142
        $region58: #{tpu_custom_call.1} parent=47 // pred_check_branch
          %411 = sbr.rel (%p409) target = $region60
        $region59: #{tpu_custom_call.1} parent=47 // pred_region
          %s412 = sand.u32 %s132, 1
          %s413 = scalar_lea.sflag [#allocation9], %s412
          %s414 = sand.u32 %s132, 1
          %s415 = smul.addr %s414, 32
          %s416 = scalar_lea.vmem [#allocation8], %s415
          %s417 = smul.u32 2, %s28
          %s419 = ssub.s32 512, 512
          %420 = vsyncadd %s413, %s419
          %s421 = smul.addr %s417, 64
          %s422 = scalar_lea.hbm %s4, %s421
          %s423 = sshll.u32 %s416, 4
          %s424 = int_to_ptr.vmem [resolvable:$true] %s423
          %429 = dma.hbm_to_vmem [thread:$0]  %s422, 512, %s424, %s413, 512, 128, 8
        $region60: #{tpu_custom_call.1} parent=47 // pred_fallthru
          _
      $region48: #{tpu_custom_call.1} parent=5 // pred_fallthru
        _
      %p430 = scmp.le.s32.totalorder 1, %s28
      %p431 = scmp.lt.s32.totalorder %s28, 5
      %p432 = pnand %p430, %p431
      %p433 = pneg %p432
      // Predicated region
      $region61: #{tpu_custom_call.1} parent=5 // pred_check
        _
      $region62: #{tpu_custom_call.1} parent=5 // pred_check_branch
        %435 = sbr.rel (%p432) target = $region64
      $region63: #{tpu_custom_call.1} parent=5 // pred_region
        %s436 = ssub.s32 %s28, 1
        %s437 = sand.u32 %s83, 1
        %s438 = scalar_lea.sflag [#allocation6], %s437
        %s439 = sand.u32 %s83, 1
        %s440 = smul.addr %s439, 64
        %s441 = scalar_lea.vmem [#allocation5], %s440
        // Predicated region
        $region65: #{tpu_custom_call.1} parent=63 // pred_check
          %p442 = pneg %p96
        $region66: #{tpu_custom_call.1} parent=63 // pred_check_branch
          %444 = sbr.rel (%p442) target = $region68
        $region67: #{tpu_custom_call.1} parent=63 // pred_region
          %445 = dma.done %s438, 1024
        $region68: #{tpu_custom_call.1} parent=63 // pred_fallthru
          _
        %s446 = sand.u32 %s135, 1
        %s447 = scalar_lea.sflag [#allocation9], %s446
        %s448 = sand.u32 %s135, 1
        %s449 = smul.addr %s448, 32
        %s450 = scalar_lea.vmem [#allocation8], %s449
        // Predicated region
        $region69: #{tpu_custom_call.1} parent=63 // pred_check
          %p451 = pneg %p148
        $region70: #{tpu_custom_call.1} parent=63 // pred_check_branch
          %453 = sbr.rel (%p451) target = $region72
        $region71: #{tpu_custom_call.1} parent=63 // pred_region
          %454 = dma.done %s447, 512
        $region72: #{tpu_custom_call.1} parent=63 // pred_fallthru
          _
        %p455 = pneg %p49
        %p456 = pneg %p46
        %p457 = pneg %p70
        %p458 = pneg %p67
        %s459 = sand.u32 %s83, 1
        %s460 = scalar_lea.sflag [#allocation6], %s459
        %s461 = sand.u32 %s83, 1
        %s462 = smul.addr %s461, 64
        %s463 = scalar_lea.vmem [#allocation5], %s462
        %p464 = pneg %p96
        %p465 = pneg %p93
        %s466 = smul.u32 2, %s33
        %p467 = scmp.lt.s32.totalorder %s466, 7
        %s468 = scalar_select %p467, %s466, 7
        %s469 = scalar_lea.vmem %s3, %s468
        %p470 = pneg %p122
        %p471 = pneg %p119
        %s472 = sand.u32 %s135, 1
        %s473 = scalar_lea.sflag [#allocation9], %s472
        %s474 = sand.u32 %s135, 1
        %s475 = smul.addr %s474, 32
        %s476 = scalar_lea.vmem [#allocation8], %s475
        %p477 = pneg %p148
        %p478 = pneg %p145
        %p479 = pneg %p169
        %p480 = pneg %p166
        %p481 = pneg %p190
        %p482 = pneg %p187
        %p483 = pneg %p211
        %p484 = pneg %p208
        %p485 = pneg %p232
        %p486 = pneg %p229
        %p487 = pneg %p253
        %p488 = pneg %p250
        %p489 = pneg %p274
        %p490 = pneg %p271
        %p491 = pneg %p295
        %p492 = pneg %p292
        %p493 = pneg %p316
        %p494 = pneg %p313
        %p495 = pneg %p337
        %p496 = pneg %p334
        %s497 = smul.u32 2, %s33
        %s498 = smul.u32 2, %s33
        %p499 = scmp.lt.s32.totalorder %s498, 7
        %s500 = scalar_select %p499, %s498, 7
        %s501 = scalar_lea.vmem %s3, %s500
        %s502 = smul.u32 2, %s33
        %s503 = smul.u32 2, %s33
        %p505 = scmp.eq.s32.totalorder %s33, 0
        // Predicated region
        $region73: #{tpu_custom_call.1} parent=63 // pred_check
          %p506 = pneg %p505
        $region74: #{tpu_custom_call.1} parent=63 // pred_check_branch
          %508 = sbr.rel (%p506) target = $region76
        $region75: #{tpu_custom_call.1} parent=63 // pred_region
          %vm509 = vcmask 0
          %510 = vst.msk [vmem:[#allocation2] sm:$0x1] %vm509, -inf
          %511 = vst.msk [vmem:[#allocation3] sm:$0x1] %vm509, 0.0
          %vm512 = vcmask 253952
          %513 = vst.msk [vmem:[#allocation4] sm:$0x1] %vm512, 0.0
        $region76: #{tpu_custom_call.1} parent=63 // pred_fallthru
          _
        %v514 = vld [vmem:[%s0] sm:$0x1]
        %v515 = vld [vmem:[%s1] sm:$0x1]
        %v517 = vlaneseq
        %v518 = vshrl.u32 %v517, 7
        %v519 = vsub.s32 0, %v518
        %v520 = vrot.slane %v515, %v519
        %521 = vrot.lane.b32.xlu0 %v520, 32
        %v522 = vpop.permute.xlu0 %521
        %vm524 = vcmask 261120
        %v525 = vsel %vm524, %v514, %v522
        %v526 = vpack.c.bf16 %v525, %v525
        %v527 = vld [vmem:[%s441] sm:$0xff]
        %v528 = vld [vmem:[%s441 + $0x8] sm:$0xff]
        %v529 = vld [vmem:[%s441 + $0x10] sm:$0xff]
        %v530 = vld [vmem:[%s441 + $0x18] sm:$0xff]
        %v531 = vld [vmem:[%s441 + $0x20] sm:$0xff]
        %v532 = vld [vmem:[%s441 + $0x28] sm:$0xff]
        %v533 = vld [vmem:[%s441 + $0x30] sm:$0xff]
        %v534 = vld [vmem:[%s441 + $0x38] sm:$0xff]
        %v535 = vld [vmem:[%s501] sm:$0x3]
        %v544 = vunpack.c.l.b16 %v527
        %v545 = vunpack.c.h.b16 %v527
        %v546 = vunpack.c.l.b16 %v528
        %v547 = vunpack.c.h.b16 %v528
        %v548 = vunpack.c.l.b16 %v529
        %v549 = vunpack.c.h.b16 %v529
        %v550 = vunpack.c.l.b16 %v530
        %v551 = vunpack.c.h.b16 %v530
        %v552 = vunpack.c.l.b16 %v531
        %v553 = vunpack.c.h.b16 %v531
        %v554 = vunpack.c.l.b16 %v532
        %v555 = vunpack.c.h.b16 %v532
        %v556 = vunpack.c.l.b16 %v533
        %v557 = vunpack.c.h.b16 %v533
        %v558 = vunpack.c.l.b16 %v534
        %v559 = vunpack.c.h.b16 %v534
        %v560 = vpack.c.b16 %v546, %v544
        %v561 = vpack.c.b16 %v547, %v545
        %v562 = vpack.c.b16 %v550, %v548
        %v563 = vpack.c.b16 %v551, %v549
        %v564 = vpack.c.b16 %v554, %v552
        %v565 = vpack.c.b16 %v555, %v553
        %v566 = vpack.c.b16 %v558, %v556
        %v567 = vpack.c.b16 %v559, %v557
        %v577 = vlaneseq
        %v578 = vshrl.u32 %v577, 7
        %v579 = vsub.s32 0, %v578
        %v580 = vrot.slane %v535, %v579
        %v581 = vlaneseq
        %v582 = vshrl.u32 %v581, 7
        %v583 = vsub.s32 1, %v582
        %v584 = vrot.slane %v535, %v583
        %vm587 = vcmask 523264
        %v589 = vsel %vm587, %v526, 0
        %591 = vmatprep.subr.bf16.mxu0 %v561
        %592 = vmatpush1.bf16.msra.mxu0 %v560
        %593 = vmatprep.subr.bf16.mxu0 %v563
        %594 = vmatpush1.bf16.msra.mxu0 %v562
        %595 = vmatprep.subr.bf16.mxu0 %v565
        %596 = vmatpush1.bf16.msra.mxu0 %v564
        %597 = vmatprep.subr.bf16.mxu0 %v567
        %598 = vmatpush1.bf16.msra.mxu0 %v566
        %599 = vmatprep.subr.bf16.mxu0 0
        %600 = vmatpush1.bf16.msra.mxu0 0
        %601 = vmatprep.subr.bf16.mxu0 0
        %602 = vmatpush1.bf16.msra.mxu0 0
        %603 = vmatprep.subr.bf16.mxu0 0
        %604 = vmatpush1.bf16.msra.mxu0 0
        %605 = vmatprep.subr.bf16.mxu0 0
        %606 = vmatpush1.bf16.msra.mxu0 0
        %607 = vmatprep.subr.bf16.mxu0 0
        %608 = vmatpush1.bf16.msra.mxu0 0
        %609 = vmatprep.subr.bf16.mxu0 0
        %610 = vmatpush1.bf16.msra.mxu0 0
        %611 = vmatprep.subr.bf16.mxu0 0
        %612 = vmatpush1.bf16.msra.mxu0 0
        %613 = vmatprep.subr.bf16.mxu0 0
        %614 = vmatpush1.bf16.msra.mxu0 0
        %615 = vmatprep.subr.bf16.mxu0 0
        %616 = vmatpush1.bf16.msra.mxu0 0
        %617 = vmatprep.subr.bf16.mxu0 0
        %618 = vmatpush1.bf16.msra.mxu0 0
        %619 = vmatprep.subr.bf16.mxu0 0
        %620 = vmatpush1.bf16.msra.mxu0 0
        %621 = vmatprep.subr.bf16.mxu0 0
        %622 = vmatpush1.bf16.msra.mxu0 0
        %623 = vmatprep.mubr.bf16.mxu0 0
        %624 = vmatmul.mubr.bf16.gmra.mrb[0].mxu0 %v589
        %v625 = vpop.f32.mrb[0].mxu0
        %v626 = vadd.f32 %v580, %v625
        %v627 = vpop.f32.mrb[0].mxu0
        %v628 = vadd.f32 %v584, %v627
        %v629 = vpop.f32.mrb[0].mxu0
        %v630 = vpop.f32.mrb[0].mxu0
        %631 = vdwg.mxu0
        %s632 = smul.u32 %s33, 256
        %v635 = vcombine.low %v626, %v628
        %v637 = vunpack.c.l.s4 1966171168
        %v638 = vunpack.c.0.s8 %v637
        %v639 = vlaneseq
        %v640 = vshrl.u32 %v639, 7
        %v641 = vsub.s32 %v638, %v640
        %v642 = vrot.slane %v635, %v641
        %v644 = vunpack.c.l.s4 1966171168
        %v645 = vunpack.c.0.s8 %v644
        %v646 = vlaneseq
        %v647 = vshrl.u32 %v646, 7
        %v648 = vsub.s32 %v645, %v647
        %v649 = vrot.slane %v642, %v648
        %s651 = sshra.s32 %s632, 7
        %s652 = sand.u32 %s632, 127
        %s653 = scalar_lea.vmem [#allocation10], %s651
        %v654 = vlaneseq
        %vm655 = vcmp.ge.s32.totalorder %v654, 0
        %vm656 = vcmp.lt.s32.totalorder %v654, 256
        %vm657 = vmand %vm655, %vm656
        %658 = vst.msk [vmem:[%s653] sm:$0x3] %vm657, %v649
        %v659 = vld [vmem:[#allocation2] sm:$0x1]
        %vm660 = vcmask 1040384
        %v661 = vsel %vm660, %v626, -inf
        %v662 = vsel %vm660, %v628, -inf
        %v663 = vmax.f32 %v661, %v662
        %664 = vmax.xlane.f32.xlu0 %v663
        %v665 = vpop.xlane.xlu0 %664
        %v666 = vmax.f32 %v659, %v665
        %v667 = vsub.f32 %v659, %v666
        %v668 = vmul.f32 %v667, 1.442695
        %v669 = vpow.pop %v668
        %671 = vset.pattern.permute.xlu0 0
        %672 = vperm.xlu0 %671, %v666
        %v673 = vpop.permute.xlu0 %672
        %v675 = vlaneseq
        %v676 = vshrl.u32 %v675, 7
        %v677 = vsub.s32 0, %v676
        %v678 = vrot.slane %v673, %v677
        %v679 = vsub.f32 %v626, %v678
        %v680 = vsub.f32 %v628, %v678
        %v681 = vmul.f32 %v679, 1.442695
        %v682 = vpow.pop %v681
        %v683 = vmul.f32 %v680, 1.442695
        %v684 = vpow.pop %v683
        %v685 = vld [vmem:[#allocation3] sm:$0x1]
        %v686 = vmul.f32 %v669, %v685
        %v687 = vsel %vm660, %v682, 0.0
        %v688 = vsel %vm660, %v684, 0.0
        %v689 = vadd.f32 %v687, %v688
        %690 = vadd.xlane.f32.xlu0 %v689
        %v691 = vpop.xlane.xlu0 %690
        %v692 = vadd.f32 %v686, %v691
        %vm693 = vcmask 0
        %694 = vst.msk [vmem:[#allocation3] sm:$0x1] %vm693, %v692
        %v695 = vld [vmem:[#allocation4] sm:$0x1]
        %697 = vset.pattern.permute.xlu0 0
        %698 = vperm.xlu0 %697, %v669
        %v699 = vpop.permute.xlu0 %698
        %v701 = vlaneseq
        %v702 = vshrl.u32 %v701, 7
        %v703 = vsub.s32 0, %v702
        %v704 = vrot.slane %v699, %v703
        %v705 = vmul.f32 %v704, %v695
        %v706 = vpack.c.bf16 %v682, %v682
        %v707 = vpack.c.bf16 %v684, %v684
        %v708 = vld [vmem:[%s450] sm:$0xff]
        %v709 = vld [vmem:[%s450 + $0x8] sm:$0xff]
        %v710 = vld [vmem:[%s450 + $0x10] sm:$0xff]
        %v711 = vld [vmem:[%s450 + $0x18] sm:$0xff]
        %v716 = vunpack.c.l.b16 %v708
        %v717 = vunpack.c.h.b16 %v708
        %v718 = vunpack.c.l.b16 %v709
        %v719 = vunpack.c.h.b16 %v709
        %v720 = vunpack.c.l.b16 %v710
        %v721 = vunpack.c.h.b16 %v710
        %v722 = vunpack.c.l.b16 %v711
        %v723 = vunpack.c.h.b16 %v711
        %v724 = vpack.c.b16 %v718, %v716
        %v725 = vpack.c.b16 %v719, %v717
        %v726 = vpack.c.b16 %v722, %v720
        %v727 = vpack.c.b16 %v723, %v721
        %732 = vmatprep.subr.bf16.mxu0 %v725
        %733 = vmatpush1.bf16.xpose.msra.mxu0 %v724
        %734 = vmatprep.subr.bf16.mxu0 %v727
        %735 = vmatpush1.bf16.xpose.msra.mxu0 %v726
        %736 = vmatprep.subr.bf16.mxu0 0
        %737 = vmatpush1.bf16.xpose.msra.mxu0 0
        %738 = vmatprep.subr.bf16.mxu0 0
        %739 = vmatpush1.bf16.xpose.msra.mxu0 0
        %740 = vmatprep.subr.bf16.mxu0 0
        %741 = vmatpush1.bf16.xpose.msra.mxu0 0
        %742 = vmatprep.subr.bf16.mxu0 0
        %743 = vmatpush1.bf16.xpose.msra.mxu0 0
        %744 = vmatprep.subr.bf16.mxu0 0
        %745 = vmatpush1.bf16.xpose.msra.mxu0 0
        %746 = vmatprep.subr.bf16.mxu0 0
        %747 = vmatpush1.bf16.xpose.msra.mxu0 0
        %748 = vmatprep.subr.bf16.mxu0 0
        %749 = vmatpush1.bf16.xpose.msra.mxu0 0
        %750 = vmatprep.subr.bf16.mxu0 0
        %751 = vmatpush1.bf16.xpose.msra.mxu0 0
        %752 = vmatprep.subr.bf16.mxu0 0
        %753 = vmatpush1.bf16.xpose.msra.mxu0 0
        %754 = vmatprep.subr.bf16.mxu0 0
        %755 = vmatpush1.bf16.xpose.msra.mxu0 0
        %756 = vmatprep.subr.bf16.mxu0 0
        %757 = vmatpush1.bf16.xpose.msra.mxu0 0
        %758 = vmatprep.subr.bf16.mxu0 0
        %759 = vmatpush1.bf16.xpose.msra.mxu0 0
        %760 = vmatprep.subr.bf16.mxu0 0
        %761 = vmatpush1.bf16.xpose.msra.mxu0 0
        %762 = vmatprep.subr.bf16.mxu0 0
        %763 = vmatpush1.bf16.xpose.msra.mxu0 0
        %764 = vmatprep.mubr.bf16.mxu0 %v707
        %765 = vmatmul.mubr.bf16.gmra.mrb[0].mxu0 %v706
        %v766 = vpop.f32.mrb[0].mxu0
        %v767 = vadd.f32 0.0, %v766
        %v768 = vpop.f32.mrb[0].mxu0
        %v769 = vpop.f32.mrb[0].mxu0
        %v770 = vpop.f32.mrb[0].mxu0
        %771 = vdwg.mxu0
        %v772 = vadd.f32 %v705, %v767
        %vm773 = vcmask 253952
        %774 = vst.msk [vmem:[#allocation4] sm:$0x1] %vm773, %v772
        %775 = vst.msk [vmem:[#allocation2] sm:$0x1] %vm693, %v666
        %p776 = scmp.eq.s32.totalorder %s33, 3
        // Predicated region
        $region77: #{tpu_custom_call.1} parent=63 // pred_check
          %p777 = pneg %p776
        $region78: #{tpu_custom_call.1} parent=63 // pred_check_branch
          %779 = sbr.rel (%p777) target = $region80
        $region79: #{tpu_custom_call.1} parent=63 // pred_region
          %v780 = vld [vmem:[#allocation3] sm:$0x1]
          %v781 = vrcp.pop %v780
          %v782 = vmul.f32 1.0, %v781
          %v783 = vld [vmem:[#allocation10] sm:$0xff]
          %v784 = vld [vmem:[#allocation2] sm:$0x1]
          %786 = vset.pattern.permute.xlu0 0
          %787 = vperm.xlu0 %786, %v784
          %v788 = vpop.permute.xlu0 %787
          %v790 = vlaneseq
          %v791 = vshrl.u32 %v790, 7
          %v792 = vsub.s32 0, %v791
          %v793 = vrot.slane %v788, %v792
          %v794 = vsub.f32 %v783, %v793
          %v795 = vmul.f32 %v794, 1.442695
          %v796 = vpow.pop %v795
          %798 = vset.pattern.permute.xlu0 0
          %799 = vperm.xlu0 %798, %v782
          %v800 = vpop.permute.xlu0 %799
          %v802 = vlaneseq
          %v803 = vshrl.u32 %v802, 7
          %v804 = vsub.s32 0, %v803
          %v805 = vrot.slane %v800, %v804
          %v806 = vmul.f32 %v796, %v805
          %807 = vst [vmem:[#allocation10] sm:$0xff] %v806
          %v808 = vld [vmem:[#allocation4] sm:$0x1]
          %v809 = vmul.f32 %v808, %v805
          %v811 = vlaneseq
          %v812 = vshrl.u32 %v811, 7
          %v813 = vsub.s32 0, %v812
          %v814 = vrot.slane %v809, %v813
          %815 = vrot.lane.b32.xlu0 %v814, 32
          %v816 = vpop.permute.xlu0 %815
          %v818 = vsel %vm524, %v514, %v816
          %v819 = vld [vmem:[%s5] sm:$0xff]
          %v820 = vld [vmem:[%s5 + $0x8] sm:$0xff]
          %v821 = vld [vmem:[%s5 + $0x10] sm:$0xff]
          %v822 = vld [vmem:[%s5 + $0x18] sm:$0xff]
          %v823 = vld [vmem:[%s5 + $0x20] sm:$0xff]
          %v824 = vld [vmem:[%s5 + $0x28] sm:$0xff]
          %v825 = vld [vmem:[%s5 + $0x30] sm:$0xff]
          %v826 = vld [vmem:[%s5 + $0x38] sm:$0xff]
          %v827 = vld [vmem:[%s6] sm:$0x1]
          %v829 = vsel %vm587, %v818, 0
          %831 = vmatprep.subr.mxu0 0.0
          %832 = vmatpush1.msra.mxu0 %v819
          %833 = vmatprep.subr.mxu0 0.0
          %834 = vmatpush1.msra.mxu0 %v820
          %835 = vmatprep.subr.mxu0 0.0
          %836 = vmatpush1.msra.mxu0 %v821
          %837 = vmatprep.subr.mxu0 0.0
          %838 = vmatpush1.msra.mxu0 %v822
          %839 = vmatprep.subr.mxu0 0.0
          %840 = vmatpush1.msra.mxu0 %v823
          %841 = vmatprep.subr.mxu0 0.0
          %842 = vmatpush1.msra.mxu0 %v824
          %843 = vmatprep.subr.mxu0 0.0
          %844 = vmatpush1.msra.mxu0 %v825
          %845 = vmatprep.subr.mxu0 0.0
          %846 = vmatpush1.msra.mxu0 %v826
          %847 = vmatprep.subr.mxu0 0.0
          %848 = vmatpush1.msra.mxu0 0.0
          %849 = vmatprep.subr.mxu0 0.0
          %850 = vmatpush1.msra.mxu0 0.0
          %851 = vmatprep.subr.mxu0 0.0
          %852 = vmatpush1.msra.mxu0 0.0
          %853 = vmatprep.subr.mxu0 0.0
          %854 = vmatpush1.msra.mxu0 0.0
          %855 = vmatprep.subr.mxu0 0.0
          %856 = vmatpush1.msra.mxu0 0.0
          %857 = vmatprep.subr.mxu0 0.0
          %858 = vmatpush1.msra.mxu0 0.0
          %859 = vmatprep.subr.mxu0 0.0
          %860 = vmatpush1.msra.mxu0 0.0
          %861 = vmatprep.subr.mxu0 0.0
          %862 = vmatpush1.msra.mxu0 0.0
          %863 = vmatprep.subr.mxu0 0.0
          %864 = vmatpush1.msra.mxu0 0.0
          %865 = vmatprep.subr.mxu0 0.0
          %866 = vmatpush1.msra.mxu0 0.0
          %867 = vmatprep.subr.mxu0 0.0
          %868 = vmatpush1.msra.mxu0 0.0
          %869 = vmatprep.subr.mxu0 0.0
          %870 = vmatpush1.msra.mxu0 0.0
          %871 = vmatprep.subr.mxu0 0.0
          %872 = vmatpush1.msra.mxu0 0.0
          %873 = vmatprep.subr.mxu0 0.0
          %874 = vmatpush1.msra.mxu0 0.0
          %875 = vmatprep.subr.mxu0 0.0
          %876 = vmatpush1.msra.mxu0 0.0
          %877 = vmatprep.subr.mxu0 0.0
          %878 = vmatpush1.msra.mxu0 0.0
          %879 = vmatprep.subr.mxu0 0.0
          %880 = vmatpush1.msra.mxu0 0.0
          %881 = vmatprep.subr.mxu0 0.0
          %882 = vmatpush1.msra.mxu0 0.0
          %883 = vmatprep.subr.mxu0 0.0
          %884 = vmatpush1.msra.mxu0 0.0
          %885 = vmatprep.subr.mxu0 0.0
          %886 = vmatpush1.msra.mxu0 0.0
          %887 = vmatprep.subr.mxu0 0.0
          %888 = vmatpush1.msra.mxu0 0.0
          %889 = vmatprep.subr.mxu0 0.0
          %890 = vmatpush1.msra.mxu0 0.0
          %891 = vmatprep.subr.mxu0 0.0
          %892 = vmatpush1.msra.mxu0 0.0
          %893 = vmatprep.subr.mxu0 0.0
          %894 = vmatpush1.msra.mxu0 0.0
          %895 = vmatprep.mubr.f32.mxu0 0.0
          %896 = vmatmul.mubr.f32.gmra.mrb[0].mxu0 %v829
          %v897 = vpop.f32.mrb[0].mxu0
          %v898 = vadd.f32 %v827, %v897
          %v899 = vpop.f32.mrb[0].mxu0
          %900 = vdwg.mxu0
          %v901 = vmax.f32 %v898, 0.0
          %v902 = vld [vmem:[%s7] sm:$0xff]
          %v903 = vld [vmem:[%s7 + $0x8] sm:$0xff]
          %v904 = vld [vmem:[%s7 + $0x10] sm:$0xff]
          %v905 = vld [vmem:[%s7 + $0x18] sm:$0xff]
          %v906 = vld [vmem:[%s8] sm:$0x1]
          %v908 = vsel %vm524, %v901, 0
          %910 = vmatprep.subr.mxu0 0.0
          %911 = vmatpush1.msra.mxu0 %v902
          %912 = vmatprep.subr.mxu0 0.0
          %913 = vmatpush1.msra.mxu0 %v903
          %914 = vmatprep.subr.mxu0 0.0
          %915 = vmatpush1.msra.mxu0 %v904
          %916 = vmatprep.subr.mxu0 0.0
          %917 = vmatpush1.msra.mxu0 %v905
          %918 = vmatprep.subr.mxu0 0.0
          %919 = vmatpush1.msra.mxu0 0.0
          %920 = vmatprep.subr.mxu0 0.0
          %921 = vmatpush1.msra.mxu0 0.0
          %922 = vmatprep.subr.mxu0 0.0
          %923 = vmatpush1.msra.mxu0 0.0
          %924 = vmatprep.subr.mxu0 0.0
          %925 = vmatpush1.msra.mxu0 0.0
          %926 = vmatprep.subr.mxu0 0.0
          %927 = vmatpush1.msra.mxu0 0.0
          %928 = vmatprep.subr.mxu0 0.0
          %929 = vmatpush1.msra.mxu0 0.0
          %930 = vmatprep.subr.mxu0 0.0
          %931 = vmatpush1.msra.mxu0 0.0
          %932 = vmatprep.subr.mxu0 0.0
          %933 = vmatpush1.msra.mxu0 0.0
          %934 = vmatprep.subr.mxu0 0.0
          %935 = vmatpush1.msra.mxu0 0.0
          %936 = vmatprep.subr.mxu0 0.0
          %937 = vmatpush1.msra.mxu0 0.0
          %938 = vmatprep.subr.mxu0 0.0
          %939 = vmatpush1.msra.mxu0 0.0
          %940 = vmatprep.subr.mxu0 0.0
          %941 = vmatpush1.msra.mxu0 0.0
          %942 = vmatprep.subr.mxu0 0.0
          %943 = vmatpush1.msra.mxu0 0.0
          %944 = vmatprep.subr.mxu0 0.0
          %945 = vmatpush1.msra.mxu0 0.0
          %946 = vmatprep.subr.mxu0 0.0
          %947 = vmatpush1.msra.mxu0 0.0
          %948 = vmatprep.subr.mxu0 0.0
          %949 = vmatpush1.msra.mxu0 0.0
          %950 = vmatprep.subr.mxu0 0.0
          %951 = vmatpush1.msra.mxu0 0.0
          %952 = vmatprep.subr.mxu0 0.0
          %953 = vmatpush1.msra.mxu0 0.0
          %954 = vmatprep.subr.mxu0 0.0
          %955 = vmatpush1.msra.mxu0 0.0
          %956 = vmatprep.subr.mxu0 0.0
          %957 = vmatpush1.msra.mxu0 0.0
          %958 = vmatprep.subr.mxu0 0.0
          %959 = vmatpush1.msra.mxu0 0.0
          %960 = vmatprep.subr.mxu0 0.0
          %961 = vmatpush1.msra.mxu0 0.0
          %962 = vmatprep.subr.mxu0 0.0
          %963 = vmatpush1.msra.mxu0 0.0
          %964 = vmatprep.subr.mxu0 0.0
          %965 = vmatpush1.msra.mxu0 0.0
          %966 = vmatprep.subr.mxu0 0.0
          %967 = vmatpush1.msra.mxu0 0.0
          %968 = vmatprep.subr.mxu0 0.0
          %969 = vmatpush1.msra.mxu0 0.0
          %970 = vmatprep.subr.mxu0 0.0
          %971 = vmatpush1.msra.mxu0 0.0
          %972 = vmatprep.subr.mxu0 0.0
          %973 = vmatpush1.msra.mxu0 0.0
          %974 = vmatprep.mubr.f32.mxu0 0.0
          %975 = vmatmul.mubr.f32.gmra.mrb[0].mxu0 %v908
          %v976 = vpop.f32.mrb[0].mxu0
          %v977 = vadd.f32 %v906, %v976
          %v978 = vpop.f32.mrb[0].mxu0
          %979 = vdwg.mxu0
          %v980 = vld [vmem:[%s9] sm:$0xff]
          %v981 = vld [vmem:[%s9 + $0x8] sm:$0xff]
          %v982 = vld [vmem:[%s9 + $0x10] sm:$0xff]
          %v983 = vld [vmem:[%s9 + $0x18] sm:$0xff]
          %v984 = vld [vmem:[%s10] sm:$0x1]
          %v985 = vsel %vm524, %v515, 0
          %987 = vmatprep.subr.mxu0 0.0
          %988 = vmatpush1.msra.mxu0 %v980
          %989 = vmatprep.subr.mxu0 0.0
          %990 = vmatpush1.msra.mxu0 %v981
          %991 = vmatprep.subr.mxu0 0.0
          %992 = vmatpush1.msra.mxu0 %v982
          %993 = vmatprep.subr.mxu0 0.0
          %994 = vmatpush1.msra.mxu0 %v983
          %995 = vmatprep.subr.mxu0 0.0
          %996 = vmatpush1.msra.mxu0 0.0
          %997 = vmatprep.subr.mxu0 0.0
          %998 = vmatpush1.msra.mxu0 0.0
          %999 = vmatprep.subr.mxu0 0.0
          %1000 = vmatpush1.msra.mxu0 0.0
          %1001 = vmatprep.subr.mxu0 0.0
          %1002 = vmatpush1.msra.mxu0 0.0
          %1003 = vmatprep.subr.mxu0 0.0
          %1004 = vmatpush1.msra.mxu0 0.0
          %1005 = vmatprep.subr.mxu0 0.0
          %1006 = vmatpush1.msra.mxu0 0.0
          %1007 = vmatprep.subr.mxu0 0.0
          %1008 = vmatpush1.msra.mxu0 0.0
          %1009 = vmatprep.subr.mxu0 0.0
          %1010 = vmatpush1.msra.mxu0 0.0
          %1011 = vmatprep.subr.mxu0 0.0
          %1012 = vmatpush1.msra.mxu0 0.0
          %1013 = vmatprep.subr.mxu0 0.0
          %1014 = vmatpush1.msra.mxu0 0.0
          %1015 = vmatprep.subr.mxu0 0.0
          %1016 = vmatpush1.msra.mxu0 0.0
          %1017 = vmatprep.subr.mxu0 0.0
          %1018 = vmatpush1.msra.mxu0 0.0
          %1019 = vmatprep.subr.mxu0 0.0
          %1020 = vmatpush1.msra.mxu0 0.0
          %1021 = vmatprep.subr.mxu0 0.0
          %1022 = vmatpush1.msra.mxu0 0.0
          %1023 = vmatprep.subr.mxu0 0.0
          %1024 = vmatpush1.msra.mxu0 0.0
          %1025 = vmatprep.subr.mxu0 0.0
          %1026 = vmatpush1.msra.mxu0 0.0
          %1027 = vmatprep.subr.mxu0 0.0
          %1028 = vmatpush1.msra.mxu0 0.0
          %1029 = vmatprep.subr.mxu0 0.0
          %1030 = vmatpush1.msra.mxu0 0.0
          %1031 = vmatprep.subr.mxu0 0.0
          %1032 = vmatpush1.msra.mxu0 0.0
          %1033 = vmatprep.subr.mxu0 0.0
          %1034 = vmatpush1.msra.mxu0 0.0
          %1035 = vmatprep.subr.mxu0 0.0
          %1036 = vmatpush1.msra.mxu0 0.0
          %1037 = vmatprep.subr.mxu0 0.0
          %1038 = vmatpush1.msra.mxu0 0.0
          %1039 = vmatprep.subr.mxu0 0.0
          %1040 = vmatpush1.msra.mxu0 0.0
          %1041 = vmatprep.subr.mxu0 0.0
          %1042 = vmatpush1.msra.mxu0 0.0
          %1043 = vmatprep.subr.mxu0 0.0
          %1044 = vmatpush1.msra.mxu0 0.0
          %1045 = vmatprep.subr.mxu0 0.0
          %1046 = vmatpush1.msra.mxu0 0.0
          %1047 = vmatprep.subr.mxu0 0.0
          %1048 = vmatpush1.msra.mxu0 0.0
          %1049 = vmatprep.subr.mxu0 0.0
          %1050 = vmatpush1.msra.mxu0 0.0
          %1051 = vmatprep.mubr.f32.mxu0 0.0
          %1052 = vmatmul.mubr.f32.gmra.mrb[0].mxu0 %v985
          %v1053 = vpop.f32.mrb[0].mxu0
          %v1054 = vadd.f32 %v984, %v1053
          %v1055 = vpop.f32.mrb[0].mxu0
          %1056 = vdwg.mxu0
          %v1057 = vadd.f32 %v977, %v1054
          %v1058 = vxor.u32 %v1057, 2147483648
          %v1059 = vmul.f32 %v1058, 1.442695
          %v1060 = vpow.pop %v1059
          %v1061 = vadd.f32 %v1060, 1.0
          %v1062 = vrcp.pop %v1061
          %v1063 = vmul.f32 1.0, %v1062
          %1065 = vrot.lane.b32.xlu0 %v1054, 64
          %v1066 = vpop.permute.xlu0 %1065
          %v1068 = vmul.f32 %v1063, %v1066
          %1070 = vrot.lane.b32.xlu0 %v1068, 64
          %v1071 = vpop.permute.xlu0 %1070
          %v1073 = vadd.f32 %v977, %v1071
          %v1074 = vtanh.pop %v1073
          %v1075 = vsub.f32 1.0, %v1063
          %1077 = vrot.lane.b32.xlu0 %v1074, 96
          %v1078 = vpop.permute.xlu0 %1077
          %v1080 = vmul.f32 %v1075, %v1078
          %v1081 = vmul.f32 %v1063, %v522
          %v1082 = vadd.f32 %v1080, %v1081
          %1084 = vrot.lane.b32.xlu0 %v1082, 96
          %v1085 = vpop.permute.xlu0 %1084
          %1087 = vst.msk [vmem:[#allocation11] sm:$0x1] %vm773, %v1085
          %v1088 = vpack.c.bf16 %v1082, %v1082
          %v1091 = vunpack.c.l.s4 1966171168
          %v1092 = vunpack.c.0.s8 %v1091
          %v1093 = vlaneseq
          %v1094 = vshrl.u32 %v1093, 7
          %v1095 = vsub.s32 %v1092, %v1094
          %v1096 = vrot.slane %v1088, %v1095
          %v1098 = vunpack.c.l.s4 1966171168
          %v1099 = vunpack.c.0.s8 %v1098
          %v1100 = vlaneseq
          %v1101 = vshrl.u32 %v1100, 7
          %v1102 = vsub.s32 %v1099, %v1101
          %v1103 = vrot.slane %v1096, %v1102
          %1104 = vrot.lane.b32.xlu0 %v1103, 96
          %v1105 = vpop.permute.xlu0 %1104
          %vm1107 = vcmask 253952
          %vm1108 = vsmask.f32 256
          %vm1109 = vmand %vm1107, %vm1108
          %v1110 = vld [vmem:[#allocation13] sm:$0x1]
          %v1111 = vsel %vm1109, %v1105, %v1110
          %1112 = vst [vmem:[#allocation13] sm:$0x1] %v1111
        $region80: #{tpu_custom_call.1} parent=63 // pred_fallthru
          _
        // Predicated region
        $region81: #{tpu_custom_call.1} parent=63 // pred_check
          %p1113 = pneg %p292
        $region82: #{tpu_custom_call.1} parent=63 // pred_check_branch
          %1115 = sbr.rel (%p1113) target = $region84
        $region83: #{tpu_custom_call.1} parent=63 // pred_region
          %s1117 = ssub.s32 128, 128
          %1118 = vsyncadd [#allocation7], %s1117
          %s1120 = sshll.u32 [#allocation10], 4
          %s1121 = int_to_ptr.vmem [resolvable:$true] %s1120
          %1123 = dma.vmem_to_hbm [thread:$0]  %s1121, 128, %s11, [#allocation7]
        $region84: #{tpu_custom_call.1} parent=63 // pred_fallthru
          _
        // Predicated region
        $region85: #{tpu_custom_call.1} parent=63 // pred_check
          %p1124 = pneg %p313
        $region86: #{tpu_custom_call.1} parent=63 // pred_check_branch
          %1126 = sbr.rel (%p1124) target = $region88
        $region87: #{tpu_custom_call.1} parent=63 // pred_region
          %s1128 = ssub.s32 16, 16
          %1129 = vsyncadd [#allocation12], %s1128
          %s1131 = sshll.u32 [#allocation11], 4
          %s1132 = int_to_ptr.vmem [resolvable:$true] %s1131
          %1134 = dma.vmem_to_hbm [thread:$0]  %s1132, 16, %s12, [#allocation12]
        $region88: #{tpu_custom_call.1} parent=63 // pred_fallthru
          _
        // Predicated region
        $region89: #{tpu_custom_call.1} parent=63 // pred_check
          %p1135 = pneg %p334
        $region90: #{tpu_custom_call.1} parent=63 // pred_check_branch
          %1137 = sbr.rel (%p1135) target = $region92
        $region91: #{tpu_custom_call.1} parent=63 // pred_region
          %s1139 = ssub.s32 16, 16
          %1140 = vsyncadd [#allocation12], %s1139
          %s1142 = sshll.u32 [#allocation13], 4
          %s1143 = int_to_ptr.vmem [resolvable:$true] %s1142
          %1145 = dma.vmem_to_hbm [thread:$0]  %s1143, 16, %s13, [#allocation12]
        $region92: #{tpu_custom_call.1} parent=63 // pred_fallthru
          _
        // Predicated region
        $region93: #{tpu_custom_call.1} parent=63 // pred_check
          %p1146 = pneg %p292
        $region94: #{tpu_custom_call.1} parent=63 // pred_check_branch
          %1148 = sbr.rel (%p1146) target = $region96
        $region95: #{tpu_custom_call.1} parent=63 // pred_region
          %1149 = dma.done [#allocation7], 128
        $region96: #{tpu_custom_call.1} parent=63 // pred_fallthru
          _
        // Predicated region
        $region97: #{tpu_custom_call.1} parent=63 // pred_check
          %p1150 = pneg %p313
        $region98: #{tpu_custom_call.1} parent=63 // pred_check_branch
          %1152 = sbr.rel (%p1150) target = $region100
        $region99: #{tpu_custom_call.1} parent=63 // pred_region
          %1153 = dma.done [#allocation12], 16
        $region100: #{tpu_custom_call.1} parent=63 // pred_fallthru
          _
        // Predicated region
        $region101: #{tpu_custom_call.1} parent=63 // pred_check
          %p1154 = pneg %p334
        $region102: #{tpu_custom_call.1} parent=63 // pred_check_branch
          %1156 = sbr.rel (%p1154) target = $region104
        $region103: #{tpu_custom_call.1} parent=63 // pred_region
          %1157 = dma.done [#allocation12], 16
        $region104: #{tpu_custom_call.1} parent=63 // pred_fallthru
          _
      $region64: #{tpu_custom_call.1} parent=5 // pred_fallthru
        _
      %p1158 = scmp.le.s32.totalorder 2, %s28
      // Predicated region
      $region105: #{tpu_custom_call.1} parent=5 // pred_check
        %p1159 = pneg %p1158
      $region106: #{tpu_custom_call.1} parent=5 // pred_check_branch
        %1161 = sbr.rel (%p1159) target = $region108
      $region107: #{tpu_custom_call.1} parent=5 // pred_region
        %s1162 = ssub.s32 %s28, 2
      $region108: #{tpu_custom_call.1} parent=5 // pred_fallthru
        _
    $region6: #{tpu_custom_call.1} parent=1 // loop_footer
      %s32 = sadd.s32 1, %s28
    $region7: #{tpu_custom_call.1} parent=1 // loop_footer_branch
      %27 = sbr.rel target = $region3
    $region8: #{tpu_custom_call.1} parent=1 // loop_exit
      _
    %1163 = vsyncpa [#allocation6], 1
    %s1164 = scalar_lea.sflag [#allocation6], 1
    %1165 = vsyncpa %s1164, 1
    %1166 = vsyncpa [#allocation9], 1
    %s1167 = scalar_lea.sflag [#allocation9], 1
    %1168 = vsyncpa %s1167, 1
    %1169 = vsyncpa [#allocation7], 1
    %s1170 = scalar_lea.sflag [#allocation7], 1
    %1171 = vsyncpa %s1170, 1
    %1172 = vsyncpa [#allocation12], 1

</llo_original>
